<compile_context>
chip_gen: v6e
topology: v6e:2x2x1
jax: 0.10.0
libtpu: 0.0.40
codegen_flags: <defaults>
</compile_context>

<pallas_src>
import math

import jax
import jax.numpy as jnp
from jax.experimental import pallas as pl
from jax.experimental.pallas import tpu as pltpu


def _gfe_kernel(x_ref, w_ref, phase_ref, o_ref):
    # x_ref: (TR, K)   w_ref: (K, C)   phase_ref: (1, C)   o_ref: (TR, C)
    x = x_ref[...].astype(jnp.float32)
    proj = jnp.dot(x, w_ref[...], preferred_element_type=jnp.float32)
    # sin(t) == cos(t - pi/2): one phase-shifted cos covers both halves -> 1 EUP pass.
    o_ref[...] = jnp.cos(proj - phase_ref[...]).astype(o_ref.dtype)


def _choose_pack(in_dim, embed_dim, max_weight_bytes=4 << 20):
    """Row-packing factor making the output lane-dense (cols % 128 == 0) and,
    weight-size budget permitting, the contraction dim lane-dense too."""
    p_cols = 128 // math.gcd(embed_dim, 128)            # lane-dense output
    p_k = 128 // math.gcd(in_dim, 128)                  # lane-dense x / MXU depth
    p_both = (p_cols * p_k) // math.gcd(p_cols, p_k)    # lcm

    def w_bytes(p):
        return (p * in_dim) * (p * embed_dim) * 4

    if w_bytes(p_both) <= max_weight_bytes:
        return p_both
    if w_bytes(p_cols) <= max_weight_bytes:
        return p_cols
    return 1


def _build_weight_and_phase(B, embed_dim, pack):
    """Packed weight (pack*in_dim, pack*embed_dim) and phase (1, pack*embed_dim).

    Within one embed_dim block, column j carries 2*pi*B[j] for the cos lanes
    (j < half_dim) and 2*pi*B[j - half_dim] for the sin lanes, so a single
    x @ W directly reproduces concat([cos, sin], -1)[..., :embed_dim].
    """
    half_dim, _ = B.shape
    sin_cols = embed_dim - half_dim
    w = jnp.concatenate([B, B[:sin_cols]], axis=0)              # (embed_dim, in_dim)
    w = (2.0 * jnp.pi) * w.T.astype(jnp.float32)                # (in_dim, embed_dim)
    phase = jnp.concatenate(
        [jnp.zeros((half_dim,), jnp.float32),
         jnp.full((sin_cols,), 0.5 * jnp.pi, jnp.float32)])     # (embed_dim,)
    if pack > 1:
        # Block-diagonal weight: one packed row computes `pack` logical rows.
        w = jnp.kron(jnp.eye(pack, dtype=jnp.float32), w)       # (pack*in_dim, pack*embed_dim)
        phase = jnp.tile(phase, pack)
    return w, phase.reshape(1, -1)


def gaussian_fourier_embedding(x, B, embed_dim, *, out_dtype=jnp.float32,
                               target_out_bytes_per_step=4 << 20):
    """x: [..., in_dim]; B: [half_dim, in_dim]. Returns [..., embed_dim]."""
    in_dim = x.shape[-1]
    half_dim = B.shape[0]
    assert half_dim == embed_dim // 2 + 1
    assert B.shape[1] == in_dim

    lead_shape = x.shape[:-1]
    x2d = x.reshape(-1, in_dim)           # native dtype; kernel casts to f32
    n = x2d.shape[0]

    # Lane-dense row packing: fold `pack` logical rows into one physical row.
    pack = _choose_pack(in_dim, embed_dim)

    # Pad the flattened row count so it divides `pack` (and so the packed row
    # count covers at least one full 8-sublane granule); dummy rows are sliced
    # off after the call.  This keeps every store an unmasked 128-lane vst.
    n_pad = ((n + pack - 1) // pack) * pack
    rows = n_pad // pack
    if rows < 8:
        rows = 8
        n_pad = rows * pack
    if n_pad != n:
        x2d = jnp.concatenate(
            [x2d, jnp.zeros((n_pad - n, in_dim), x2d.dtype)], axis=0)

    k = pack * in_dim
    cols = pack * embed_dim
    x_in = x2d.reshape(rows, k)

    w, phase = _build_weight_and_phase(B.astype(jnp.float32), embed_dim, pack)

    out_bytes = jnp.dtype(out_dtype).itemsize
    x_bytes = jnp.dtype(x_in.dtype).itemsize

    # Row tile from an output-byte budget (~4 MiB/step): amortizes the
    # ~0.35 us/step pipeline overhead on this HBM-write-bound kernel while
    # staying inside v5e's 16 MiB default scoped VMEM with double buffering.
    tr = max(8, (target_out_bytes_per_step // max(1, cols * out_bytes)) // 8 * 8)
    tr = min(tr, max(8, ((rows + 7) // 8) * 8))
    # v7x megacore: keep >= 2 grid steps for medium inputs so the "parallel"
    # row axis can be sharded across both TensorCores.
    if rows >= 16 and pl.cdiv(rows, tr) == 1:
        tr = max(8, (((rows + 1) // 2 + 7) // 8) * 8)
    grid = (pl.cdiv(rows, tr),)

    cost = pl.CostEstimate(
        flops=2 * rows * k * cols,
        transcendentals=rows * cols,
        bytes_accessed=rows * k * x_bytes + rows * cols * out_bytes + k * cols * 4,
    )

    out = pl.pallas_call(
        _gfe_kernel,
        out_shape=jax.ShapeDtypeStruct((rows, cols), out_dtype),
        grid_spec=pltpu.PrefetchScalarGridSpec(
            num_scalar_prefetch=0,
            grid=grid,
            in_specs=[
                pl.BlockSpec((tr, k), lambda i: (i, 0)),          # x row tile
                # Weight / phase are grid-invariant -> single-buffered.
                pl.BlockSpec((k, cols), lambda i: (0, 0),
                             pipeline_mode=pl.Buffered(1)),
                pl.BlockSpec((1, cols), lambda i: (0, 0),
                             pipeline_mode=pl.Buffered(1)),
            ],
            out_specs=pl.BlockSpec((tr, cols), lambda i: (i, 0)),
        ),
        compiler_params=pltpu.CompilerParams(
            dimension_semantics=("parallel",),
        ),
        cost_estimate=cost,
    )(x_in, w, phase)

    # Free row-major reinterpretation + drop padded dummy rows.
    out = out.reshape(n_pad, embed_dim)
    if n_pad != n:
        out = out[:n]
    return out.reshape(*lead_shape, embed_dim)


def gaussian_fourier_embedding_ref(x, B, embed_dim):
    proj = 2.0 * jnp.pi * jnp.matmul(x, B.T)
    full = jnp.concatenate([jnp.cos(proj), jnp.sin(proj)], axis=-1)
    return full[..., :embed_dim]


if __name__ == "__main__":
    embed_dim = 64
    in_dim = 4
    batch = 2
    seq = 8

    key = jax.random.PRNGKey(0)
    kx, kb = jax.random.split(key)

    # x: [batch, seq, in_dim] (e.g. per-token time features)
    x = jax.random.normal(kx, (batch, seq, in_dim), dtype=jnp.float32)

    # Fixed "Gaussian" projection matrix (torch re-samples per forward; fixed
    # here for reproducibility).
    half_dim = embed_dim // 2 + 1
    B = jax.random.normal(kb, (half_dim, in_dim), dtype=jnp.float32)

    ref = gaussian_fourier_embedding_ref(x, B, embed_dim)

    out = gaussian_fourier_embedding(x, B, embed_dim)
    out = jax.block_until_ready(out)
    assert out.shape == (batch, seq, embed_dim), out.shape
    assert jnp.allclose(out, ref, atol=1e-5, rtol=1e-5), float(jnp.max(jnp.abs(out - ref)))

    # bf16 output path (halves the dominant HBM write traffic; f32 compute inside).
    out_bf16 = jax.block_until_ready(
        gaussian_fourier_embedding(x, B, embed_dim, out_dtype=jnp.bfloat16))
    assert out_bf16.shape == (batch, seq, embed_dim), out_bf16.shape
    assert jnp.allclose(out_bf16.astype(jnp.float32), ref, atol=2e-2, rtol=2e-2)

    print("KERNEL_OK")
</pallas_src>

<mosaic_0001>
module attributes {stable_mosaic.version = 11 : i64} {
  func.func @_gfe_kernel(%arg0: i32, %arg1: memref<8x128xf32, #tpu.memory_space<vmem>>, %arg2: memref<128x2048xf32, #tpu.memory_space<vmem>>, %arg3: memref<1x2048xf32, #tpu.memory_space<vmem>>, %arg4: memref<8x2048xf32, #tpu.memory_space<vmem>>) attributes {dimension_semantics = [#tpu.dimension_semantics<parallel>], iteration_bounds = array<i64: 1>, scalar_prefetch = 0 : i64, scratch_operands = 0 : i64, tpu.core_type = #tpu.core_type<tc>, window_params = [{transform_indices = @transform_0, window_bounds = array<i64: 8, 128>}, {pipeline_mode = #tpu.pipeline_mode<synchronous>, transform_indices = @transform_1, window_bounds = array<i64: 128, 2048>}, {pipeline_mode = #tpu.pipeline_mode<synchronous>, transform_indices = @transform_2, window_bounds = array<i64: 1, 2048>}, {transform_indices = @transform_3, window_bounds = array<i64: 8, 2048>}]} {
    %c0 = arith.constant 0 : index
    %c0_0 = arith.constant 0 : index
    %0 = vector.load %arg1[%c0, %c0_0] : memref<8x128xf32, #tpu.memory_space<vmem>>, vector<8x128xf32>
    %c0_1 = arith.constant 0 : index
    %c0_2 = arith.constant 0 : index
    %1 = vector.load %arg2[%c0_1, %c0_2] : memref<128x2048xf32, #tpu.memory_space<vmem>>, vector<128x2048xf32>
    %cst = arith.constant dense<0.000000e+00> : vector<8x2048xf32>
    %2 = tpu.matmul %0, %1, %cst {dimension_numbers = #tpu.dot_dimension_numbers<[1], [0], [0], [1], [0, 0, 1, 1], [], []>} : vector<8x128xf32>, vector<128x2048xf32>, vector<8x2048xf32> -> vector<8x2048xf32>
    %c0_3 = arith.constant 0 : index
    %c0_4 = arith.constant 0 : index
    %3 = vector.load %arg3[%c0_3, %c0_4] : memref<1x2048xf32, #tpu.memory_space<vmem>>, vector<1x2048xf32>
    %4 = vector.broadcast %3 : vector<1x2048xf32> to vector<8x2048xf32>
    %5 = arith.subf %2, %4 : vector<8x2048xf32>
    %6 = math.cos %5 : vector<8x2048xf32>
    %c0_5 = arith.constant 0 : index
    %c0_6 = arith.constant 0 : index
    %7 = vector.load %arg4[%c0_5, %c0_6] : memref<8x2048xf32, #tpu.memory_space<vmem>>, vector<8x2048xf32>
    tpu.vector_store %arg4[%c0_5, %c0_6], %6 {strides = array<i32>} : memref<8x2048xf32, #tpu.memory_space<vmem>>, vector<8x2048xf32>,
    return
  }
  func.func @transform_0(%arg0: i32) -> (i32, i32) {
    %c0_i32 = arith.constant 0 : i32
    %c0_i32_0 = arith.constant 0 : i32
    return %arg0, %c0_i32 : i32, i32
  }
  func.func @transform_1(%arg0: i32) -> (i32, i32) {
    %c0_i32 = arith.constant 0 : i32
    %c0_i32_0 = arith.constant 0 : i32
    %c0_i32_1 = arith.constant 0 : i32
    return %c0_i32, %c0_i32_0 : i32, i32
  }
  func.func @transform_2(%arg0: i32) -> (i32, i32) {
    %c0_i32 = arith.constant 0 : i32
    %c0_i32_0 = arith.constant 0 : i32
    %c0_i32_1 = arith.constant 0 : i32
    return %c0_i32, %c0_i32_0 : i32, i32
  }
  func.func @transform_3(%arg0: i32) -> (i32, i32) {
    %c0_i32 = arith.constant 0 : i32
    %c0_i32_0 = arith.constant 0 : i32
    return %arg0, %c0_i32 : i32, i32
  }
}

</mosaic_0001>

<llo_original>
// kernel: tpu_custom_call.1
$region0: #{tpu_custom_call.1}
  #allocation0 [shape = 'u32[]', space=smem, size = 0x4, offset = 0x4, fixed_abs, tag = 'smem constant byte address 0x4 - core index']
  #allocation1 [shape = 'u32[144,128]{1,0:T(1,128)}', space=vmem, size = 0x12000, scoped, tag = 'internal scratch']
  %s0 = inlined_call_operand.hbm [shape: f32[8,128], index: 0, kind: input, shape index: {}]
  %s1 = inlined_call_operand.hbm [shape: f32[128,2048], index: 1, kind: input, shape index: {}]
  %s2 = inlined_call_operand.hbm [shape: f32[1,2048], index: 2, kind: input, shape index: {}]
  %s3 = inlined_call_operand.hbm [shape: f32[8,2048], index: 3, kind: output, shape index: {}]
  %s4 = sld [smem:[#allocation0]]
  $region34: #{tpu_custom_call.1} parent=0
    _
  %s6 = ssub.s32 1, %s4
  %s7 = scalar_select 0, %s6, %s4
  $region1: #{tpu_custom_call.1} parent=0
    #allocation2 [shape = 'u8[4096]{0}', space=vmem, size = 0x1000, scoped, tag = 'input window, operand 0, single buffered']
    #allocation3 [shape = 's32[1]{0}', space=sflag, size = 0x4, scoped, tag = 'scoped memory for tpu_custom_call.1']
    #allocation4 [shape = 's32[1]{0}', space=sflag, size = 0x4, scoped, tag = 'scoped memory for tpu_custom_call.1']
    #allocation5 [shape = 'u8[1048576]{0}', space=vmem, size = 0x100000, scoped, tag = 'input window, operand 1, single buffered']
    #allocation6 [shape = 's32[1]{0}', space=sflag, size = 0x4, scoped, tag = 'scoped memory for tpu_custom_call.1']
    #allocation7 [shape = 'u8[8192]{0}', space=vmem, size = 0x2000, scoped, tag = 'input window, operand 2, single buffered']
    #allocation8 [shape = 'u8[65536]{0}', space=vmem, size = 0x10000, scoped, tag = 'output window, operand 0, single buffered']
    %8 = vsyncpa [#allocation3], 0
    %9 = vsyncpa [#allocation6], 0
    %10 = vsyncpa [#allocation4], 0
    // Predicated region
    $region2: #{tpu_custom_call.1} parent=1 // pred_check
      _
    $region3: #{tpu_custom_call.1} parent=1 // pred_check_branch
      %12 = sbr.rel (0) target = $region5
    $region4: #{tpu_custom_call.1} parent=1 // pred_region
      %s14 = ssub.s32 128, 128
      %15 = vsyncadd [#allocation3], %s14
      %s17 = sshll.u32 [#allocation2], 4
      %s18 = int_to_ptr.vmem [resolvable:$true] %s17
      %20 = dma.hbm_to_vmem [thread:$0]  %s0, 128, %s18, [#allocation3]
    $region5: #{tpu_custom_call.1} parent=1 // pred_fallthru
      _
    // Predicated region
    $region6: #{tpu_custom_call.1} parent=1 // pred_check
      _
    $region7: #{tpu_custom_call.1} parent=1 // pred_check_branch
      %22 = sbr.rel (0) target = $region9
    $region8: #{tpu_custom_call.1} parent=1 // pred_region
      %s24 = ssub.s32 32768, 32768
      %25 = vsyncadd [#allocation6], %s24
      %s26 = sshll.u32 [#allocation5], 4
      %s27 = int_to_ptr.vmem [resolvable:$true] %s26
      %32 = dma.hbm_to_vmem [thread:$0]  %s1, 32768, %s27, [#allocation6], 2048, 2048, 128
    $region9: #{tpu_custom_call.1} parent=1 // pred_fallthru
      _
    // Predicated region
    $region10: #{tpu_custom_call.1} parent=1 // pred_check
      _
    $region11: #{tpu_custom_call.1} parent=1 // pred_check_branch
      %34 = sbr.rel (0) target = $region13
    $region12: #{tpu_custom_call.1} parent=1 // pred_region
      %s36 = ssub.s32 256, 256
      %37 = vsyncadd [#allocation6], %s36
      %s39 = sshll.u32 [#allocation7], 4
      %s40 = int_to_ptr.vmem [resolvable:$true] %s39
      %42 = dma.hbm_to_vmem [thread:$0]  %s2, 256, %s40, [#allocation6]
    $region13: #{tpu_custom_call.1} parent=1 // pred_fallthru
      _
    // Predicated region
    $region14: #{tpu_custom_call.1} parent=1 // pred_check
      _
    $region15: #{tpu_custom_call.1} parent=1 // pred_check_branch
      %44 = sbr.rel (0) target = $region17
    $region16: #{tpu_custom_call.1} parent=1 // pred_region
      %45 = dma.done [#allocation3], 128
    $region17: #{tpu_custom_call.1} parent=1 // pred_fallthru
      _
    // Predicated region
    $region18: #{tpu_custom_call.1} parent=1 // pred_check
      _
    $region19: #{tpu_custom_call.1} parent=1 // pred_check_branch
      %47 = sbr.rel (0) target = $region21
    $region20: #{tpu_custom_call.1} parent=1 // pred_region
      %48 = dma.done [#allocation6], 32768
    $region21: #{tpu_custom_call.1} parent=1 // pred_fallthru
      _
    // Predicated region
    $region22: #{tpu_custom_call.1} parent=1 // pred_check
      _
    $region23: #{tpu_custom_call.1} parent=1 // pred_check_branch
      %50 = sbr.rel (0) target = $region25
    $region24: #{tpu_custom_call.1} parent=1 // pred_region
      %51 = dma.done [#allocation6], 256
    $region25: #{tpu_custom_call.1} parent=1 // pred_fallthru
      _
    %v52 = vld [vmem:[#allocation2] sm:$0xff]
    %v53 = vld [vmem:[#allocation5] sm:$0xff]
    %v54 = vld [vmem:[#allocation5 + $0x8] sm:$0xff]
    %v55 = vld [vmem:[#allocation5 + $0x10] sm:$0xff]
    %v56 = vld [vmem:[#allocation5 + $0x18] sm:$0xff]
    %v57 = vld [vmem:[#allocation5 + $0x20] sm:$0xff]
    %v58 = vld [vmem:[#allocation5 + $0x28] sm:$0xff]
    %v59 = vld [vmem:[#allocation5 + $0x30] sm:$0xff]
    %v60 = vld [vmem:[#allocation5 + $0x38] sm:$0xff]
    %v61 = vld [vmem:[#allocation5 + $0x40] sm:$0xff]
    %v62 = vld [vmem:[#allocation5 + $0x48] sm:$0xff]
    %v63 = vld [vmem:[#allocation5 + $0x50] sm:$0xff]
    %v64 = vld [vmem:[#allocation5 + $0x58] sm:$0xff]
    %v65 = vld [vmem:[#allocation5 + $0x60] sm:$0xff]
    %v66 = vld [vmem:[#allocation5 + $0x68] sm:$0xff]
    %v67 = vld [vmem:[#allocation5 + $0x70] sm:$0xff]
    %v68 = vld [vmem:[#allocation5 + $0x78] sm:$0xff]
    %v69 = vld [vmem:[#allocation5 + $0x80] sm:$0xff]
    %v70 = vld [vmem:[#allocation5 + $0x88] sm:$0xff]
    %v71 = vld [vmem:[#allocation5 + $0x90] sm:$0xff]
    %v72 = vld [vmem:[#allocation5 + $0x98] sm:$0xff]
    %v73 = vld [vmem:[#allocation5 + $0xa0] sm:$0xff]
    %v74 = vld [vmem:[#allocation5 + $0xa8] sm:$0xff]
    %v75 = vld [vmem:[#allocation5 + $0xb0] sm:$0xff]
    %v76 = vld [vmem:[#allocation5 + $0xb8] sm:$0xff]
    %v77 = vld [vmem:[#allocation5 + $0xc0] sm:$0xff]
    %v78 = vld [vmem:[#allocation5 + $0xc8] sm:$0xff]
    %v79 = vld [vmem:[#allocation5 + $0xd0] sm:$0xff]
    %v80 = vld [vmem:[#allocation5 + $0xd8] sm:$0xff]
    %v81 = vld [vmem:[#allocation5 + $0xe0] sm:$0xff]
    %v82 = vld [vmem:[#allocation5 + $0xe8] sm:$0xff]
    %v83 = vld [vmem:[#allocation5 + $0xf0] sm:$0xff]
    %v84 = vld [vmem:[#allocation5 + $0xf8] sm:$0xff]
    %v85 = vld [vmem:[#allocation5 + $0x100] sm:$0xff]
    %v86 = vld [vmem:[#allocation5 + $0x108] sm:$0xff]
    %v87 = vld [vmem:[#allocation5 + $0x110] sm:$0xff]
    %v88 = vld [vmem:[#allocation5 + $0x118] sm:$0xff]
    %v89 = vld [vmem:[#allocation5 + $0x120] sm:$0xff]
    %v90 = vld [vmem:[#allocation5 + $0x128] sm:$0xff]
    %v91 = vld [vmem:[#allocation5 + $0x130] sm:$0xff]
    %v92 = vld [vmem:[#allocation5 + $0x138] sm:$0xff]
    %v93 = vld [vmem:[#allocation5 + $0x140] sm:$0xff]
    %v94 = vld [vmem:[#allocation5 + $0x148] sm:$0xff]
    %v95 = vld [vmem:[#allocation5 + $0x150] sm:$0xff]
    %v96 = vld [vmem:[#allocation5 + $0x158] sm:$0xff]
    %v97 = vld [vmem:[#allocation5 + $0x160] sm:$0xff]
    %v98 = vld [vmem:[#allocation5 + $0x168] sm:$0xff]
    %v99 = vld [vmem:[#allocation5 + $0x170] sm:$0xff]
    %v100 = vld [vmem:[#allocation5 + $0x178] sm:$0xff]
    %v101 = vld [vmem:[#allocation5 + $0x180] sm:$0xff]
    %v102 = vld [vmem:[#allocation5 + $0x188] sm:$0xff]
    %v103 = vld [vmem:[#allocation5 + $0x190] sm:$0xff]
    %v104 = vld [vmem:[#allocation5 + $0x198] sm:$0xff]
    %v105 = vld [vmem:[#allocation5 + $0x1a0] sm:$0xff]
    %v106 = vld [vmem:[#allocation5 + $0x1a8] sm:$0xff]
    %v107 = vld [vmem:[#allocation5 + $0x1b0] sm:$0xff]
    %v108 = vld [vmem:[#allocation5 + $0x1b8] sm:$0xff]
    %v109 = vld [vmem:[#allocation5 + $0x1c0] sm:$0xff]
    %v110 = vld [vmem:[#allocation5 + $0x1c8] sm:$0xff]
    %v111 = vld [vmem:[#allocation5 + $0x1d0] sm:$0xff]
    %v112 = vld [vmem:[#allocation5 + $0x1d8] sm:$0xff]
    %v113 = vld [vmem:[#allocation5 + $0x1e0] sm:$0xff]
    %v114 = vld [vmem:[#allocation5 + $0x1e8] sm:$0xff]
    %v115 = vld [vmem:[#allocation5 + $0x1f0] sm:$0xff]
    %v116 = vld [vmem:[#allocation5 + $0x1f8] sm:$0xff]
    %v117 = vld [vmem:[#allocation5 + $0x200] sm:$0xff]
    %v118 = vld [vmem:[#allocation5 + $0x208] sm:$0xff]
    %v119 = vld [vmem:[#allocation5 + $0x210] sm:$0xff]
    %v120 = vld [vmem:[#allocation5 + $0x218] sm:$0xff]
    %v121 = vld [vmem:[#allocation5 + $0x220] sm:$0xff]
    %v122 = vld [vmem:[#allocation5 + $0x228] sm:$0xff]
    %v123 = vld [vmem:[#allocation5 + $0x230] sm:$0xff]
    %v124 = vld [vmem:[#allocation5 + $0x238] sm:$0xff]
    %v125 = vld [vmem:[#allocation5 + $0x240] sm:$0xff]
    %v126 = vld [vmem:[#allocation5 + $0x248] sm:$0xff]
    %v127 = vld [vmem:[#allocation5 + $0x250] sm:$0xff]
    %v128 = vld [vmem:[#allocation5 + $0x258] sm:$0xff]
    %v129 = vld [vmem:[#allocation5 + $0x260] sm:$0xff]
    %v130 = vld [vmem:[#allocation5 + $0x268] sm:$0xff]
    %v131 = vld [vmem:[#allocation5 + $0x270] sm:$0xff]
    %v132 = vld [vmem:[#allocation5 + $0x278] sm:$0xff]
    %v133 = vld [vmem:[#allocation5 + $0x280] sm:$0xff]
    %v134 = vld [vmem:[#allocation5 + $0x288] sm:$0xff]
    %v135 = vld [vmem:[#allocation5 + $0x290] sm:$0xff]
    %v136 = vld [vmem:[#allocation5 + $0x298] sm:$0xff]
    %v137 = vld [vmem:[#allocation5 + $0x2a0] sm:$0xff]
    %v138 = vld [vmem:[#allocation5 + $0x2a8] sm:$0xff]
    %v139 = vld [vmem:[#allocation5 + $0x2b0] sm:$0xff]
    %v140 = vld [vmem:[#allocation5 + $0x2b8] sm:$0xff]
    %v141 = vld [vmem:[#allocation5 + $0x2c0] sm:$0xff]
    %v142 = vld [vmem:[#allocation5 + $0x2c8] sm:$0xff]
    %v143 = vld [vmem:[#allocation5 + $0x2d0] sm:$0xff]
    %v144 = vld [vmem:[#allocation5 + $0x2d8] sm:$0xff]
    %v145 = vld [vmem:[#allocation5 + $0x2e0] sm:$0xff]
    %v146 = vld [vmem:[#allocation5 + $0x2e8] sm:$0xff]
    %v147 = vld [vmem:[#allocation5 + $0x2f0] sm:$0xff]
    %v148 = vld [vmem:[#allocation5 + $0x2f8] sm:$0xff]
    %v149 = vld [vmem:[#allocation5 + $0x300] sm:$0xff]
    %v150 = vld [vmem:[#allocation5 + $0x308] sm:$0xff]
    %v151 = vld [vmem:[#allocation5 + $0x310] sm:$0xff]
    %v152 = vld [vmem:[#allocation5 + $0x318] sm:$0xff]
    %v153 = vld [vmem:[#allocation5 + $0x320] sm:$0xff]
    %v154 = vld [vmem:[#allocation5 + $0x328] sm:$0xff]
    %v155 = vld [vmem:[#allocation5 + $0x330] sm:$0xff]
    %v156 = vld [vmem:[#allocation5 + $0x338] sm:$0xff]
    %v157 = vld [vmem:[#allocation5 + $0x340] sm:$0xff]
    %v158 = vld [vmem:[#allocation5 + $0x348] sm:$0xff]
    %v159 = vld [vmem:[#allocation5 + $0x350] sm:$0xff]
    %v160 = vld [vmem:[#allocation5 + $0x358] sm:$0xff]
    %v161 = vld [vmem:[#allocation5 + $0x360] sm:$0xff]
    %v162 = vld [vmem:[#allocation5 + $0x368] sm:$0xff]
    %v163 = vld [vmem:[#allocation5 + $0x370] sm:$0xff]
    %v164 = vld [vmem:[#allocation5 + $0x378] sm:$0xff]
    %v165 = vld [vmem:[#allocation5 + $0x380] sm:$0xff]
    %v166 = vld [vmem:[#allocation5 + $0x388] sm:$0xff]
    %v167 = vld [vmem:[#allocation5 + $0x390] sm:$0xff]
    %v168 = vld [vmem:[#allocation5 + $0x398] sm:$0xff]
    %v169 = vld [vmem:[#allocation5 + $0x3a0] sm:$0xff]
    %v170 = vld [vmem:[#allocation5 + $0x3a8] sm:$0xff]
    %v171 = vld [vmem:[#allocation5 + $0x3b0] sm:$0xff]
    %v172 = vld [vmem:[#allocation5 + $0x3b8] sm:$0xff]
    %v173 = vld [vmem:[#allocation5 + $0x3c0] sm:$0xff]
    %v174 = vld [vmem:[#allocation5 + $0x3c8] sm:$0xff]
    %v175 = vld [vmem:[#allocation5 + $0x3d0] sm:$0xff]
    %v176 = vld [vmem:[#allocation5 + $0x3d8] sm:$0xff]
    %v177 = vld [vmem:[#allocation5 + $0x3e0] sm:$0xff]
    %v178 = vld [vmem:[#allocation5 + $0x3e8] sm:$0xff]
    %v179 = vld [vmem:[#allocation5 + $0x3f0] sm:$0xff]
    %v180 = vld [vmem:[#allocation5 + $0x3f8] sm:$0xff]
    %v181 = vld [vmem:[#allocation5 + $0x400] sm:$0xff]
    %v182 = vld [vmem:[#allocation5 + $0x408] sm:$0xff]
    %v183 = vld [vmem:[#allocation5 + $0x410] sm:$0xff]
    %v184 = vld [vmem:[#allocation5 + $0x418] sm:$0xff]
    %v185 = vld [vmem:[#allocation5 + $0x420] sm:$0xff]
    %v186 = vld [vmem:[#allocation5 + $0x428] sm:$0xff]
    %v187 = vld [vmem:[#allocation5 + $0x430] sm:$0xff]
    %v188 = vld [vmem:[#allocation5 + $0x438] sm:$0xff]
    %v189 = vld [vmem:[#allocation5 + $0x440] sm:$0xff]
    %v190 = vld [vmem:[#allocation5 + $0x448] sm:$0xff]
    %v191 = vld [vmem:[#allocation5 + $0x450] sm:$0xff]
    %v192 = vld [vmem:[#allocation5 + $0x458] sm:$0xff]
    %v193 = vld [vmem:[#allocation5 + $0x460] sm:$0xff]
    %v194 = vld [vmem:[#allocation5 + $0x468] sm:$0xff]
    %v195 = vld [vmem:[#allocation5 + $0x470] sm:$0xff]
    %v196 = vld [vmem:[#allocation5 + $0x478] sm:$0xff]
    %v197 = vld [vmem:[#allocation5 + $0x480] sm:$0xff]
    %v198 = vld [vmem:[#allocation5 + $0x488] sm:$0xff]
    %v199 = vld [vmem:[#allocation5 + $0x490] sm:$0xff]
    %v200 = vld [vmem:[#allocation5 + $0x498] sm:$0xff]
    %v201 = vld [vmem:[#allocation5 + $0x4a0] sm:$0xff]
    %v202 = vld [vmem:[#allocation5 + $0x4a8] sm:$0xff]
    %v203 = vld [vmem:[#allocation5 + $0x4b0] sm:$0xff]
    %v204 = vld [vmem:[#allocation5 + $0x4b8] sm:$0xff]
    %v205 = vld [vmem:[#allocation5 + $0x4c0] sm:$0xff]
    %v206 = vld [vmem:[#allocation5 + $0x4c8] sm:$0xff]
    %v207 = vld [vmem:[#allocation5 + $0x4d0] sm:$0xff]
    %v208 = vld [vmem:[#allocation5 + $0x4d8] sm:$0xff]
    %v209 = vld [vmem:[#allocation5 + $0x4e0] sm:$0xff]
    %v210 = vld [vmem:[#allocation5 + $0x4e8] sm:$0xff]
    %v211 = vld [vmem:[#allocation5 + $0x4f0] sm:$0xff]
    %v212 = vld [vmem:[#allocation5 + $0x4f8] sm:$0xff]
    %v213 = vld [vmem:[#allocation5 + $0x500] sm:$0xff]
    %v214 = vld [vmem:[#allocation5 + $0x508] sm:$0xff]
    %v215 = vld [vmem:[#allocation5 + $0x510] sm:$0xff]
    %v216 = vld [vmem:[#allocation5 + $0x518] sm:$0xff]
    %v217 = vld [vmem:[#allocation5 + $0x520] sm:$0xff]
    %v218 = vld [vmem:[#allocation5 + $0x528] sm:$0xff]
    %v219 = vld [vmem:[#allocation5 + $0x530] sm:$0xff]
    %v220 = vld [vmem:[#allocation5 + $0x538] sm:$0xff]
    %v221 = vld [vmem:[#allocation5 + $0x540] sm:$0xff]
    %v222 = vld [vmem:[#allocation5 + $0x548] sm:$0xff]
    %v223 = vld [vmem:[#allocation5 + $0x550] sm:$0xff]
    %v224 = vld [vmem:[#allocation5 + $0x558] sm:$0xff]
    %v225 = vld [vmem:[#allocation5 + $0x560] sm:$0xff]
    %v226 = vld [vmem:[#allocation5 + $0x568] sm:$0xff]
    %v227 = vld [vmem:[#allocation5 + $0x570] sm:$0xff]
    %v228 = vld [vmem:[#allocation5 + $0x578] sm:$0xff]
    %v229 = vld [vmem:[#allocation5 + $0x580] sm:$0xff]
    %v230 = vld [vmem:[#allocation5 + $0x588] sm:$0xff]
    %v231 = vld [vmem:[#allocation5 + $0x590] sm:$0xff]
    %v232 = vld [vmem:[#allocation5 + $0x598] sm:$0xff]
    %v233 = vld [vmem:[#allocation5 + $0x5a0] sm:$0xff]
    %v234 = vld [vmem:[#allocation5 + $0x5a8] sm:$0xff]
    %v235 = vld [vmem:[#allocation5 + $0x5b0] sm:$0xff]
    %v236 = vld [vmem:[#allocation5 + $0x5b8] sm:$0xff]
    %v237 = vld [vmem:[#allocation5 + $0x5c0] sm:$0xff]
    %v238 = vld [vmem:[#allocation5 + $0x5c8] sm:$0xff]
    %v239 = vld [vmem:[#allocation5 + $0x5d0] sm:$0xff]
    %v240 = vld [vmem:[#allocation5 + $0x5d8] sm:$0xff]
    %v241 = vld [vmem:[#allocation5 + $0x5e0] sm:$0xff]
    %v242 = vld [vmem:[#allocation5 + $0x5e8] sm:$0xff]
    %v243 = vld [vmem:[#allocation5 + $0x5f0] sm:$0xff]
    %v244 = vld [vmem:[#allocation5 + $0x5f8] sm:$0xff]
    %v245 = vld [vmem:[#allocation5 + $0x600] sm:$0xff]
    %v246 = vld [vmem:[#allocation5 + $0x608] sm:$0xff]
    %v247 = vld [vmem:[#allocation5 + $0x610] sm:$0xff]
    %v248 = vld [vmem:[#allocation5 + $0x618] sm:$0xff]
    %v249 = vld [vmem:[#allocation5 + $0x620] sm:$0xff]
    %v250 = vld [vmem:[#allocation5 + $0x628] sm:$0xff]
    %v251 = vld [vmem:[#allocation5 + $0x630] sm:$0xff]
    %v252 = vld [vmem:[#allocation5 + $0x638] sm:$0xff]
    %v253 = vld [vmem:[#allocation5 + $0x640] sm:$0xff]
    %v254 = vld [vmem:[#allocation5 + $0x648] sm:$0xff]
    %v255 = vld [vmem:[#allocation5 + $0x650] sm:$0xff]
    %v256 = vld [vmem:[#allocation5 + $0x658] sm:$0xff]
    %v257 = vld [vmem:[#allocation5 + $0x660] sm:$0xff]
    %v258 = vld [vmem:[#allocation5 + $0x668] sm:$0xff]
    %v259 = vld [vmem:[#allocation5 + $0x670] sm:$0xff]
    %v260 = vld [vmem:[#allocation5 + $0x678] sm:$0xff]
    %v261 = vld [vmem:[#allocation5 + $0x680] sm:$0xff]
    %v262 = vld [vmem:[#allocation5 + $0x688] sm:$0xff]
    %v263 = vld [vmem:[#allocation5 + $0x690] sm:$0xff]
    %v264 = vld [vmem:[#allocation5 + $0x698] sm:$0xff]
    %v265 = vld [vmem:[#allocation5 + $0x6a0] sm:$0xff]
    %v266 = vld [vmem:[#allocation5 + $0x6a8] sm:$0xff]
    %v267 = vld [vmem:[#allocation5 + $0x6b0] sm:$0xff]
    %v268 = vld [vmem:[#allocation5 + $0x6b8] sm:$0xff]
    %v269 = vld [vmem:[#allocation5 + $0x6c0] sm:$0xff]
    %v270 = vld [vmem:[#allocation5 + $0x6c8] sm:$0xff]
    %v271 = vld [vmem:[#allocation5 + $0x6d0] sm:$0xff]
    %v272 = vld [vmem:[#allocation5 + $0x6d8] sm:$0xff]
    %v273 = vld [vmem:[#allocation5 + $0x6e0] sm:$0xff]
    %v274 = vld [vmem:[#allocation5 + $0x6e8] sm:$0xff]
    %v275 = vld [vmem:[#allocation5 + $0x6f0] sm:$0xff]
    %v276 = vld [vmem:[#allocation5 + $0x6f8] sm:$0xff]
    %v277 = vld [vmem:[#allocation5 + $0x700] sm:$0xff]
    %v278 = vld [vmem:[#allocation5 + $0x708] sm:$0xff]
    %v279 = vld [vmem:[#allocation5 + $0x710] sm:$0xff]
    %v280 = vld [vmem:[#allocation5 + $0x718] sm:$0xff]
    %v281 = vld [vmem:[#allocation5 + $0x720] sm:$0xff]
    %v282 = vld [vmem:[#allocation5 + $0x728] sm:$0xff]
    %v283 = vld [vmem:[#allocation5 + $0x730] sm:$0xff]
    %v284 = vld [vmem:[#allocation5 + $0x738] sm:$0xff]
    %v285 = vld [vmem:[#allocation5 + $0x740] sm:$0xff]
    %v286 = vld [vmem:[#allocation5 + $0x748] sm:$0xff]
    %v287 = vld [vmem:[#allocation5 + $0x750] sm:$0xff]
    %v288 = vld [vmem:[#allocation5 + $0x758] sm:$0xff]
    %v289 = vld [vmem:[#allocation5 + $0x760] sm:$0xff]
    %v290 = vld [vmem:[#allocation5 + $0x768] sm:$0xff]
    %v291 = vld [vmem:[#allocation5 + $0x770] sm:$0xff]
    %v292 = vld [vmem:[#allocation5 + $0x778] sm:$0xff]
    %v293 = vld [vmem:[#allocation5 + $0x780] sm:$0xff]
    %v294 = vld [vmem:[#allocation5 + $0x788] sm:$0xff]
    %v295 = vld [vmem:[#allocation5 + $0x790] sm:$0xff]
    %v296 = vld [vmem:[#allocation5 + $0x798] sm:$0xff]
    %v297 = vld [vmem:[#allocation5 + $0x7a0] sm:$0xff]
    %v298 = vld [vmem:[#allocation5 + $0x7a8] sm:$0xff]
    %v299 = vld [vmem:[#allocation5 + $0x7b0] sm:$0xff]
    %v300 = vld [vmem:[#allocation5 + $0x7b8] sm:$0xff]
    %v301 = vld [vmem:[#allocation5 + $0x7c0] sm:$0xff]
    %v302 = vld [vmem:[#allocation5 + $0x7c8] sm:$0xff]
    %v303 = vld [vmem:[#allocation5 + $0x7d0] sm:$0xff]
    %v304 = vld [vmem:[#allocation5 + $0x7d8] sm:$0xff]
    %v305 = vld [vmem:[#allocation5 + $0x7e0] sm:$0xff]
    %v306 = vld [vmem:[#allocation5 + $0x7e8] sm:$0xff]
    %v307 = vld [vmem:[#allocation5 + $0x7f0] sm:$0xff]
    %v308 = vld [vmem:[#allocation5 + $0x7f8] sm:$0xff]
    %309 = vmatprep.subr.mxu0 %v294
    %310 = vmatpush1.msra.mxu0 %v293
    %311 = vmatprep.subr.mxu0 %v278
    %312 = vmatpush1.msra.mxu0 %v277
    %313 = vmatprep.subr.mxu0 %v262
    %314 = vmatpush1.msra.mxu0 %v261
    %315 = vmatprep.subr.mxu0 %v246
    %316 = vmatpush1.msra.mxu0 %v245
    %317 = vmatprep.subr.mxu0 %v230
    %318 = vmatpush1.msra.mxu0 %v229
    %319 = vmatprep.subr.mxu0 %v214
    %320 = vmatpush1.msra.mxu0 %v213
    %321 = vmatprep.subr.mxu0 %v198
    %322 = vmatpush1.msra.mxu0 %v197
    %323 = vmatprep.subr.mxu0 %v182
    %324 = vmatpush1.msra.mxu0 %v181
    %325 = vmatprep.subr.mxu0 %v166
    %326 = vmatpush1.msra.mxu0 %v165
    %327 = vmatprep.subr.mxu0 %v150
    %328 = vmatpush1.msra.mxu0 %v149
    %329 = vmatprep.subr.mxu0 %v134
    %330 = vmatpush1.msra.mxu0 %v133
    %331 = vmatprep.subr.mxu0 %v118
    %332 = vmatpush1.msra.mxu0 %v117
    %333 = vmatprep.subr.mxu0 %v102
    %334 = vmatpush1.msra.mxu0 %v101
    %335 = vmatprep.subr.mxu0 %v86
    %336 = vmatpush1.msra.mxu0 %v85
    %337 = vmatprep.subr.mxu0 %v70
    %338 = vmatpush1.msra.mxu0 %v69
    %339 = vmatprep.subr.mxu0 %v54
    %340 = vmatpush1.msra.mxu0 %v53
    %341 = vmatprep.subr.mxu0 0.0
    %342 = vmatpush2.msra.mxu0 0.0
    %343 = vmatprep.subr.mxu0 0.0
    %344 = vmatpush2.msra.mxu0 0.0
    %345 = vmatprep.subr.mxu0 0.0
    %346 = vmatpush2.msra.mxu0 0.0
    %347 = vmatprep.subr.mxu0 0.0
    %348 = vmatpush2.msra.mxu0 0.0
    %349 = vmatprep.subr.mxu0 0.0
    %350 = vmatpush2.msra.mxu0 0.0
    %351 = vmatprep.subr.mxu0 0.0
    %352 = vmatpush2.msra.mxu0 0.0
    %353 = vmatprep.subr.mxu0 0.0
    %354 = vmatpush2.msra.mxu0 0.0
    %355 = vmatprep.subr.mxu0 0.0
    %356 = vmatpush2.msra.mxu0 0.0
    %357 = vmatprep.subr.mxu0 0.0
    %358 = vmatpush2.msra.mxu0 0.0
    %359 = vmatprep.subr.mxu0 0.0
    %360 = vmatpush2.msra.mxu0 0.0
    %361 = vmatprep.subr.mxu0 0.0
    %362 = vmatpush2.msra.mxu0 0.0
    %363 = vmatprep.subr.mxu0 0.0
    %364 = vmatpush2.msra.mxu0 0.0
    %365 = vmatprep.subr.mxu0 0.0
    %366 = vmatpush2.msra.mxu0 0.0
    %367 = vmatprep.subr.mxu0 0.0
    %368 = vmatpush2.msra.mxu0 0.0
    %369 = vmatprep.subr.mxu0 0.0
    %370 = vmatpush2.msra.mxu0 0.0
    %371 = vmatprep.subr.mxu0 0.0
    %372 = vmatpush2.msra.mxu0 0.0
    %373 = vmatprep.mubr.f32.mxu0 0.0
    %374 = vmatmul.mubr.f32.gmra.mxu0 %v52
    %v375 = vpop.f32.mrf.mxu0
    %v376 = vadd.f32 0.0, %v375
    %v377 = vpop.f32.mrf.mxu0
    %v378 = vadd.f32 0.0, %v377
    %379 = vdwg.mxu0
    %380 = vmatprep.subr.mxu0 %v296
    %381 = vmatpush1.msra.mxu0 %v295
    %382 = vmatprep.subr.mxu0 %v280
    %383 = vmatpush1.msra.mxu0 %v279
    %384 = vmatprep.subr.mxu0 %v264
    %385 = vmatpush1.msra.mxu0 %v263
    %386 = vmatprep.subr.mxu0 %v248
    %387 = vmatpush1.msra.mxu0 %v247
    %388 = vmatprep.subr.mxu0 %v232
    %389 = vmatpush1.msra.mxu0 %v231
    %390 = vmatprep.subr.mxu0 %v216
    %391 = vmatpush1.msra.mxu0 %v215
    %392 = vmatprep.subr.mxu0 %v200
    %393 = vmatpush1.msra.mxu0 %v199
    %394 = vmatprep.subr.mxu0 %v184
    %395 = vmatpush1.msra.mxu0 %v183
    %396 = vmatprep.subr.mxu0 %v168
    %397 = vmatpush1.msra.mxu0 %v167
    %398 = vmatprep.subr.mxu0 %v152
    %399 = vmatpush1.msra.mxu0 %v151
    %400 = vmatprep.subr.mxu0 %v136
    %401 = vmatpush1.msra.mxu0 %v135
    %402 = vmatprep.subr.mxu0 %v120
    %403 = vmatpush1.msra.mxu0 %v119
    %404 = vmatprep.subr.mxu0 %v104
    %405 = vmatpush1.msra.mxu0 %v103
    %406 = vmatprep.subr.mxu0 %v88
    %407 = vmatpush1.msra.mxu0 %v87
    %408 = vmatprep.subr.mxu0 %v72
    %409 = vmatpush1.msra.mxu0 %v71
    %410 = vmatprep.subr.mxu0 %v56
    %411 = vmatpush1.msra.mxu0 %v55
    %412 = vmatprep.subr.mxu0 0.0
    %413 = vmatpush2.msra.mxu0 0.0
    %414 = vmatprep.subr.mxu0 0.0
    %415 = vmatpush2.msra.mxu0 0.0
    %416 = vmatprep.subr.mxu0 0.0
    %417 = vmatpush2.msra.mxu0 0.0
    %418 = vmatprep.subr.mxu0 0.0
    %419 = vmatpush2.msra.mxu0 0.0
    %420 = vmatprep.subr.mxu0 0.0
    %421 = vmatpush2.msra.mxu0 0.0
    %422 = vmatprep.subr.mxu0 0.0
    %423 = vmatpush2.msra.mxu0 0.0
    %424 = vmatprep.subr.mxu0 0.0
    %425 = vmatpush2.msra.mxu0 0.0
    %426 = vmatprep.subr.mxu0 0.0
    %427 = vmatpush2.msra.mxu0 0.0
    %428 = vmatprep.subr.mxu0 0.0
    %429 = vmatpush2.msra.mxu0 0.0
    %430 = vmatprep.subr.mxu0 0.0
    %431 = vmatpush2.msra.mxu0 0.0
    %432 = vmatprep.subr.mxu0 0.0
    %433 = vmatpush2.msra.mxu0 0.0
    %434 = vmatprep.subr.mxu0 0.0
    %435 = vmatpush2.msra.mxu0 0.0
    %436 = vmatprep.subr.mxu0 0.0
    %437 = vmatpush2.msra.mxu0 0.0
    %438 = vmatprep.subr.mxu0 0.0
    %439 = vmatpush2.msra.mxu0 0.0
    %440 = vmatprep.subr.mxu0 0.0
    %441 = vmatpush2.msra.mxu0 0.0
    %442 = vmatprep.subr.mxu0 0.0
    %443 = vmatpush2.msra.mxu0 0.0
    %444 = vmatprep.mubr.f32.mxu0 0.0
    %445 = vmatmul.mubr.f32.gmra.mxu0 %v52
    %v446 = vpop.f32.mrf.mxu0
    %v447 = vadd.f32 0.0, %v446
    %v448 = vpop.f32.mrf.mxu0
    %v449 = vadd.f32 0.0, %v448
    %450 = vdwg.mxu0
    %451 = vmatprep.subr.mxu0 %v298
    %452 = vmatpush1.msra.mxu0 %v297
    %453 = vmatprep.subr.mxu0 %v282
    %454 = vmatpush1.msra.mxu0 %v281
    %455 = vmatprep.subr.mxu0 %v266
    %456 = vmatpush1.msra.mxu0 %v265
    %457 = vmatprep.subr.mxu0 %v250
    %458 = vmatpush1.msra.mxu0 %v249
    %459 = vmatprep.subr.mxu0 %v234
    %460 = vmatpush1.msra.mxu0 %v233
    %461 = vmatprep.subr.mxu0 %v218
    %462 = vmatpush1.msra.mxu0 %v217
    %463 = vmatprep.subr.mxu0 %v202
    %464 = vmatpush1.msra.mxu0 %v201
    %465 = vmatprep.subr.mxu0 %v186
    %466 = vmatpush1.msra.mxu0 %v185
    %467 = vmatprep.subr.mxu0 %v170
    %468 = vmatpush1.msra.mxu0 %v169
    %469 = vmatprep.subr.mxu0 %v154
    %470 = vmatpush1.msra.mxu0 %v153
    %471 = vmatprep.subr.mxu0 %v138
    %472 = vmatpush1.msra.mxu0 %v137
    %473 = vmatprep.subr.mxu0 %v122
    %474 = vmatpush1.msra.mxu0 %v121
    %475 = vmatprep.subr.mxu0 %v106
    %476 = vmatpush1.msra.mxu0 %v105
    %477 = vmatprep.subr.mxu0 %v90
    %478 = vmatpush1.msra.mxu0 %v89
    %479 = vmatprep.subr.mxu0 %v74
    %480 = vmatpush1.msra.mxu0 %v73
    %481 = vmatprep.subr.mxu0 %v58
    %482 = vmatpush1.msra.mxu0 %v57
    %483 = vmatprep.subr.mxu0 0.0
    %484 = vmatpush2.msra.mxu0 0.0
    %485 = vmatprep.subr.mxu0 0.0
    %486 = vmatpush2.msra.mxu0 0.0
    %487 = vmatprep.subr.mxu0 0.0
    %488 = vmatpush2.msra.mxu0 0.0
    %489 = vmatprep.subr.mxu0 0.0
    %490 = vmatpush2.msra.mxu0 0.0
    %491 = vmatprep.subr.mxu0 0.0
    %492 = vmatpush2.msra.mxu0 0.0
    %493 = vmatprep.subr.mxu0 0.0
    %494 = vmatpush2.msra.mxu0 0.0
    %495 = vmatprep.subr.mxu0 0.0
    %496 = vmatpush2.msra.mxu0 0.0
    %497 = vmatprep.subr.mxu0 0.0
    %498 = vmatpush2.msra.mxu0 0.0
    %499 = vmatprep.subr.mxu0 0.0
    %500 = vmatpush2.msra.mxu0 0.0
    %501 = vmatprep.subr.mxu0 0.0
    %502 = vmatpush2.msra.mxu0 0.0
    %503 = vmatprep.subr.mxu0 0.0
    %504 = vmatpush2.msra.mxu0 0.0
    %505 = vmatprep.subr.mxu0 0.0
    %506 = vmatpush2.msra.mxu0 0.0
    %507 = vmatprep.subr.mxu0 0.0
    %508 = vmatpush2.msra.mxu0 0.0
    %509 = vmatprep.subr.mxu0 0.0
    %510 = vmatpush2.msra.mxu0 0.0
    %511 = vmatprep.subr.mxu0 0.0
    %512 = vmatpush2.msra.mxu0 0.0
    %513 = vmatprep.subr.mxu0 0.0
    %514 = vmatpush2.msra.mxu0 0.0
    %515 = vmatprep.mubr.f32.mxu0 0.0
    %516 = vmatmul.mubr.f32.gmra.mxu0 %v52
    %v517 = vpop.f32.mrf.mxu0
    %v518 = vadd.f32 0.0, %v517
    %v519 = vpop.f32.mrf.mxu0
    %v520 = vadd.f32 0.0, %v519
    %521 = vdwg.mxu0
    %522 = vmatprep.subr.mxu0 %v300
    %523 = vmatpush1.msra.mxu0 %v299
    %524 = vmatprep.subr.mxu0 %v284
    %525 = vmatpush1.msra.mxu0 %v283
    %526 = vmatprep.subr.mxu0 %v268
    %527 = vmatpush1.msra.mxu0 %v267
    %528 = vmatprep.subr.mxu0 %v252
    %529 = vmatpush1.msra.mxu0 %v251
    %530 = vmatprep.subr.mxu0 %v236
    %531 = vmatpush1.msra.mxu0 %v235
    %532 = vmatprep.subr.mxu0 %v220
    %533 = vmatpush1.msra.mxu0 %v219
    %534 = vmatprep.subr.mxu0 %v204
    %535 = vmatpush1.msra.mxu0 %v203
    %536 = vmatprep.subr.mxu0 %v188
    %537 = vmatpush1.msra.mxu0 %v187
    %538 = vmatprep.subr.mxu0 %v172
    %539 = vmatpush1.msra.mxu0 %v171
    %540 = vmatprep.subr.mxu0 %v156
    %541 = vmatpush1.msra.mxu0 %v155
    %542 = vmatprep.subr.mxu0 %v140
    %543 = vmatpush1.msra.mxu0 %v139
    %544 = vmatprep.subr.mxu0 %v124
    %545 = vmatpush1.msra.mxu0 %v123
    %546 = vmatprep.subr.mxu0 %v108
    %547 = vmatpush1.msra.mxu0 %v107
    %548 = vmatprep.subr.mxu0 %v92
    %549 = vmatpush1.msra.mxu0 %v91
    %550 = vmatprep.subr.mxu0 %v76
    %551 = vmatpush1.msra.mxu0 %v75
    %552 = vmatprep.subr.mxu0 %v60
    %553 = vmatpush1.msra.mxu0 %v59
    %554 = vmatprep.subr.mxu0 0.0
    %555 = vmatpush2.msra.mxu0 0.0
    %556 = vmatprep.subr.mxu0 0.0
    %557 = vmatpush2.msra.mxu0 0.0
    %558 = vmatprep.subr.mxu0 0.0
    %559 = vmatpush2.msra.mxu0 0.0
    %560 = vmatprep.subr.mxu0 0.0
    %561 = vmatpush2.msra.mxu0 0.0
    %562 = vmatprep.subr.mxu0 0.0
    %563 = vmatpush2.msra.mxu0 0.0
    %564 = vmatprep.subr.mxu0 0.0
    %565 = vmatpush2.msra.mxu0 0.0
    %566 = vmatprep.subr.mxu0 0.0
    %567 = vmatpush2.msra.mxu0 0.0
    %568 = vmatprep.subr.mxu0 0.0
    %569 = vmatpush2.msra.mxu0 0.0
    %570 = vmatprep.subr.mxu0 0.0
    %571 = vmatpush2.msra.mxu0 0.0
    %572 = vmatprep.subr.mxu0 0.0
    %573 = vmatpush2.msra.mxu0 0.0
    %574 = vmatprep.subr.mxu0 0.0
    %575 = vmatpush2.msra.mxu0 0.0
    %576 = vmatprep.subr.mxu0 0.0
    %577 = vmatpush2.msra.mxu0 0.0
    %578 = vmatprep.subr.mxu0 0.0
    %579 = vmatpush2.msra.mxu0 0.0
    %580 = vmatprep.subr.mxu0 0.0
    %581 = vmatpush2.msra.mxu0 0.0
    %582 = vmatprep.subr.mxu0 0.0
    %583 = vmatpush2.msra.mxu0 0.0
    %584 = vmatprep.subr.mxu0 0.0
    %585 = vmatpush2.msra.mxu0 0.0
    %586 = vmatprep.mubr.f32.mxu0 0.0
    %587 = vmatmul.mubr.f32.gmra.mxu0 %v52
    %v588 = vpop.f32.mrf.mxu0
    %v589 = vadd.f32 0.0, %v588
    %v590 = vpop.f32.mrf.mxu0
    %v591 = vadd.f32 0.0, %v590
    %592 = vdwg.mxu0
    %593 = vmatprep.subr.mxu0 %v302
    %594 = vmatpush1.msra.mxu0 %v301
    %595 = vmatprep.subr.mxu0 %v286
    %596 = vmatpush1.msra.mxu0 %v285
    %597 = vmatprep.subr.mxu0 %v270
    %598 = vmatpush1.msra.mxu0 %v269
    %599 = vmatprep.subr.mxu0 %v254
    %600 = vmatpush1.msra.mxu0 %v253
    %601 = vmatprep.subr.mxu0 %v238
    %602 = vmatpush1.msra.mxu0 %v237
    %603 = vmatprep.subr.mxu0 %v222
    %604 = vmatpush1.msra.mxu0 %v221
    %605 = vmatprep.subr.mxu0 %v206
    %606 = vmatpush1.msra.mxu0 %v205
    %607 = vmatprep.subr.mxu0 %v190
    %608 = vmatpush1.msra.mxu0 %v189
    %609 = vmatprep.subr.mxu0 %v174
    %610 = vmatpush1.msra.mxu0 %v173
    %611 = vmatprep.subr.mxu0 %v158
    %612 = vmatpush1.msra.mxu0 %v157
    %613 = vmatprep.subr.mxu0 %v142
    %614 = vmatpush1.msra.mxu0 %v141
    %615 = vmatprep.subr.mxu0 %v126
    %616 = vmatpush1.msra.mxu0 %v125
    %617 = vmatprep.subr.mxu0 %v110
    %618 = vmatpush1.msra.mxu0 %v109
    %619 = vmatprep.subr.mxu0 %v94
    %620 = vmatpush1.msra.mxu0 %v93
    %621 = vmatprep.subr.mxu0 %v78
    %622 = vmatpush1.msra.mxu0 %v77
    %623 = vmatprep.subr.mxu0 %v62
    %624 = vmatpush1.msra.mxu0 %v61
    %625 = vmatprep.subr.mxu0 0.0
    %626 = vmatpush2.msra.mxu0 0.0
    %627 = vmatprep.subr.mxu0 0.0
    %628 = vmatpush2.msra.mxu0 0.0
    %629 = vmatprep.subr.mxu0 0.0
    %630 = vmatpush2.msra.mxu0 0.0
    %631 = vmatprep.subr.mxu0 0.0
    %632 = vmatpush2.msra.mxu0 0.0
    %633 = vmatprep.subr.mxu0 0.0
    %634 = vmatpush2.msra.mxu0 0.0
    %635 = vmatprep.subr.mxu0 0.0
    %636 = vmatpush2.msra.mxu0 0.0
    %637 = vmatprep.subr.mxu0 0.0
    %638 = vmatpush2.msra.mxu0 0.0
    %639 = vmatprep.subr.mxu0 0.0
    %640 = vmatpush2.msra.mxu0 0.0
    %641 = vmatprep.subr.mxu0 0.0
    %642 = vmatpush2.msra.mxu0 0.0
    %643 = vmatprep.subr.mxu0 0.0
    %644 = vmatpush2.msra.mxu0 0.0
    %645 = vmatprep.subr.mxu0 0.0
    %646 = vmatpush2.msra.mxu0 0.0
    %647 = vmatprep.subr.mxu0 0.0
    %648 = vmatpush2.msra.mxu0 0.0
    %649 = vmatprep.subr.mxu0 0.0
    %650 = vmatpush2.msra.mxu0 0.0
    %651 = vmatprep.subr.mxu0 0.0
    %652 = vmatpush2.msra.mxu0 0.0
    %653 = vmatprep.subr.mxu0 0.0
    %654 = vmatpush2.msra.mxu0 0.0
    %655 = vmatprep.subr.mxu0 0.0
    %656 = vmatpush2.msra.mxu0 0.0
    %657 = vmatprep.mubr.f32.mxu0 0.0
    %658 = vmatmul.mubr.f32.gmra.mxu0 %v52
    %v659 = vpop.f32.mrf.mxu0
    %v660 = vadd.f32 0.0, %v659
    %v661 = vpop.f32.mrf.mxu0
    %v662 = vadd.f32 0.0, %v661
    %663 = vdwg.mxu0
    %664 = vmatprep.subr.mxu0 %v304
    %665 = vmatpush1.msra.mxu0 %v303
    %666 = vmatprep.subr.mxu0 %v288
    %667 = vmatpush1.msra.mxu0 %v287
    %668 = vmatprep.subr.mxu0 %v272
    %669 = vmatpush1.msra.mxu0 %v271
    %670 = vmatprep.subr.mxu0 %v256
    %671 = vmatpush1.msra.mxu0 %v255
    %672 = vmatprep.subr.mxu0 %v240
    %673 = vmatpush1.msra.mxu0 %v239
    %674 = vmatprep.subr.mxu0 %v224
    %675 = vmatpush1.msra.mxu0 %v223
    %676 = vmatprep.subr.mxu0 %v208
    %677 = vmatpush1.msra.mxu0 %v207
    %678 = vmatprep.subr.mxu0 %v192
    %679 = vmatpush1.msra.mxu0 %v191
    %680 = vmatprep.subr.mxu0 %v176
    %681 = vmatpush1.msra.mxu0 %v175
    %682 = vmatprep.subr.mxu0 %v160
    %683 = vmatpush1.msra.mxu0 %v159
    %684 = vmatprep.subr.mxu0 %v144
    %685 = vmatpush1.msra.mxu0 %v143
    %686 = vmatprep.subr.mxu0 %v128
    %687 = vmatpush1.msra.mxu0 %v127
    %688 = vmatprep.subr.mxu0 %v112
    %689 = vmatpush1.msra.mxu0 %v111
    %690 = vmatprep.subr.mxu0 %v96
    %691 = vmatpush1.msra.mxu0 %v95
    %692 = vmatprep.subr.mxu0 %v80
    %693 = vmatpush1.msra.mxu0 %v79
    %694 = vmatprep.subr.mxu0 %v64
    %695 = vmatpush1.msra.mxu0 %v63
    %696 = vmatprep.subr.mxu0 0.0
    %697 = vmatpush2.msra.mxu0 0.0
    %698 = vmatprep.subr.mxu0 0.0
    %699 = vmatpush2.msra.mxu0 0.0
    %700 = vmatprep.subr.mxu0 0.0
    %701 = vmatpush2.msra.mxu0 0.0
    %702 = vmatprep.subr.mxu0 0.0
    %703 = vmatpush2.msra.mxu0 0.0
    %704 = vmatprep.subr.mxu0 0.0
    %705 = vmatpush2.msra.mxu0 0.0
    %706 = vmatprep.subr.mxu0 0.0
    %707 = vmatpush2.msra.mxu0 0.0
    %708 = vmatprep.subr.mxu0 0.0
    %709 = vmatpush2.msra.mxu0 0.0
    %710 = vmatprep.subr.mxu0 0.0
    %711 = vmatpush2.msra.mxu0 0.0
    %712 = vmatprep.subr.mxu0 0.0
    %713 = vmatpush2.msra.mxu0 0.0
    %714 = vmatprep.subr.mxu0 0.0
    %715 = vmatpush2.msra.mxu0 0.0
    %716 = vmatprep.subr.mxu0 0.0
    %717 = vmatpush2.msra.mxu0 0.0
    %718 = vmatprep.subr.mxu0 0.0
    %719 = vmatpush2.msra.mxu0 0.0
    %720 = vmatprep.subr.mxu0 0.0
    %721 = vmatpush2.msra.mxu0 0.0
    %722 = vmatprep.subr.mxu0 0.0
    %723 = vmatpush2.msra.mxu0 0.0
    %724 = vmatprep.subr.mxu0 0.0
    %725 = vmatpush2.msra.mxu0 0.0
    %726 = vmatprep.subr.mxu0 0.0
    %727 = vmatpush2.msra.mxu0 0.0
    %728 = vmatprep.mubr.f32.mxu0 0.0
    %729 = vmatmul.mubr.f32.gmra.mxu0 %v52
    %v730 = vpop.f32.mrf.mxu0
    %v731 = vadd.f32 0.0, %v730
    %v732 = vpop.f32.mrf.mxu0
    %v733 = vadd.f32 0.0, %v732
    %734 = vdwg.mxu0
    %735 = vmatprep.subr.mxu0 %v306
    %736 = vmatpush1.msra.mxu0 %v305
    %737 = vmatprep.subr.mxu0 %v290
    %738 = vmatpush1.msra.mxu0 %v289
    %739 = vmatprep.subr.mxu0 %v274
    %740 = vmatpush1.msra.mxu0 %v273
    %741 = vmatprep.subr.mxu0 %v258
    %742 = vmatpush1.msra.mxu0 %v257
    %743 = vmatprep.subr.mxu0 %v242
    %744 = vmatpush1.msra.mxu0 %v241
    %745 = vmatprep.subr.mxu0 %v226
    %746 = vmatpush1.msra.mxu0 %v225
    %747 = vmatprep.subr.mxu0 %v210
    %748 = vmatpush1.msra.mxu0 %v209
    %749 = vmatprep.subr.mxu0 %v194
    %750 = vmatpush1.msra.mxu0 %v193
    %751 = vmatprep.subr.mxu0 %v178
    %752 = vmatpush1.msra.mxu0 %v177
    %753 = vmatprep.subr.mxu0 %v162
    %754 = vmatpush1.msra.mxu0 %v161
    %755 = vmatprep.subr.mxu0 %v146
    %756 = vmatpush1.msra.mxu0 %v145
    %757 = vmatprep.subr.mxu0 %v130
    %758 = vmatpush1.msra.mxu0 %v129
    %759 = vmatprep.subr.mxu0 %v114
    %760 = vmatpush1.msra.mxu0 %v113
    %761 = vmatprep.subr.mxu0 %v98
    %762 = vmatpush1.msra.mxu0 %v97
    %763 = vmatprep.subr.mxu0 %v82
    %764 = vmatpush1.msra.mxu0 %v81
    %765 = vmatprep.subr.mxu0 %v66
    %766 = vmatpush1.msra.mxu0 %v65
    %767 = vmatprep.subr.mxu0 0.0
    %768 = vmatpush2.msra.mxu0 0.0
    %769 = vmatprep.subr.mxu0 0.0
    %770 = vmatpush2.msra.mxu0 0.0
    %771 = vmatprep.subr.mxu0 0.0
    %772 = vmatpush2.msra.mxu0 0.0
    %773 = vmatprep.subr.mxu0 0.0
    %774 = vmatpush2.msra.mxu0 0.0
    %775 = vmatprep.subr.mxu0 0.0
    %776 = vmatpush2.msra.mxu0 0.0
    %777 = vmatprep.subr.mxu0 0.0
    %778 = vmatpush2.msra.mxu0 0.0
    %779 = vmatprep.subr.mxu0 0.0
    %780 = vmatpush2.msra.mxu0 0.0
    %781 = vmatprep.subr.mxu0 0.0
    %782 = vmatpush2.msra.mxu0 0.0
    %783 = vmatprep.subr.mxu0 0.0
    %784 = vmatpush2.msra.mxu0 0.0
    %785 = vmatprep.subr.mxu0 0.0
    %786 = vmatpush2.msra.mxu0 0.0
    %787 = vmatprep.subr.mxu0 0.0
    %788 = vmatpush2.msra.mxu0 0.0
    %789 = vmatprep.subr.mxu0 0.0
    %790 = vmatpush2.msra.mxu0 0.0
    %791 = vmatprep.subr.mxu0 0.0
    %792 = vmatpush2.msra.mxu0 0.0
    %793 = vmatprep.subr.mxu0 0.0
    %794 = vmatpush2.msra.mxu0 0.0
    %795 = vmatprep.subr.mxu0 0.0
    %796 = vmatpush2.msra.mxu0 0.0
    %797 = vmatprep.subr.mxu0 0.0
    %798 = vmatpush2.msra.mxu0 0.0
    %799 = vmatprep.mubr.f32.mxu0 0.0
    %800 = vmatmul.mubr.f32.gmra.mxu0 %v52
    %v801 = vpop.f32.mrf.mxu0
    %v802 = vadd.f32 0.0, %v801
    %v803 = vpop.f32.mrf.mxu0
    %v804 = vadd.f32 0.0, %v803
    %805 = vdwg.mxu0
    %806 = vmatprep.subr.mxu0 %v308
    %807 = vmatpush1.msra.mxu0 %v307
    %808 = vmatprep.subr.mxu0 %v292
    %809 = vmatpush1.msra.mxu0 %v291
    %810 = vmatprep.subr.mxu0 %v276
    %811 = vmatpush1.msra.mxu0 %v275
    %812 = vmatprep.subr.mxu0 %v260
    %813 = vmatpush1.msra.mxu0 %v259
    %814 = vmatprep.subr.mxu0 %v244
    %815 = vmatpush1.msra.mxu0 %v243
    %816 = vmatprep.subr.mxu0 %v228
    %817 = vmatpush1.msra.mxu0 %v227
    %818 = vmatprep.subr.mxu0 %v212
    %819 = vmatpush1.msra.mxu0 %v211
    %820 = vmatprep.subr.mxu0 %v196
    %821 = vmatpush1.msra.mxu0 %v195
    %822 = vmatprep.subr.mxu0 %v180
    %823 = vmatpush1.msra.mxu0 %v179
    %824 = vmatprep.subr.mxu0 %v164
    %825 = vmatpush1.msra.mxu0 %v163
    %826 = vmatprep.subr.mxu0 %v148
    %827 = vmatpush1.msra.mxu0 %v147
    %828 = vmatprep.subr.mxu0 %v132
    %829 = vmatpush1.msra.mxu0 %v131
    %830 = vmatprep.subr.mxu0 %v116
    %831 = vmatpush1.msra.mxu0 %v115
    %832 = vmatprep.subr.mxu0 %v100
    %833 = vmatpush1.msra.mxu0 %v99
    %834 = vmatprep.subr.mxu0 %v84
    %835 = vmatpush1.msra.mxu0 %v83
    %836 = vmatprep.subr.mxu0 %v68
    %837 = vmatpush1.msra.mxu0 %v67
    %838 = vmatprep.subr.mxu0 0.0
    %839 = vmatpush2.msra.mxu0 0.0
    %840 = vmatprep.subr.mxu0 0.0
    %841 = vmatpush2.msra.mxu0 0.0
    %842 = vmatprep.subr.mxu0 0.0
    %843 = vmatpush2.msra.mxu0 0.0
    %844 = vmatprep.subr.mxu0 0.0
    %845 = vmatpush2.msra.mxu0 0.0
    %846 = vmatprep.subr.mxu0 0.0
    %847 = vmatpush2.msra.mxu0 0.0
    %848 = vmatprep.subr.mxu0 0.0
    %849 = vmatpush2.msra.mxu0 0.0
    %850 = vmatprep.subr.mxu0 0.0
    %851 = vmatpush2.msra.mxu0 0.0
    %852 = vmatprep.subr.mxu0 0.0
    %853 = vmatpush2.msra.mxu0 0.0
    %854 = vmatprep.subr.mxu0 0.0
    %855 = vmatpush2.msra.mxu0 0.0
    %856 = vmatprep.subr.mxu0 0.0
    %857 = vmatpush2.msra.mxu0 0.0
    %858 = vmatprep.subr.mxu0 0.0
    %859 = vmatpush2.msra.mxu0 0.0
    %860 = vmatprep.subr.mxu0 0.0
    %861 = vmatpush2.msra.mxu0 0.0
    %862 = vmatprep.subr.mxu0 0.0
    %863 = vmatpush2.msra.mxu0 0.0
    %864 = vmatprep.subr.mxu0 0.0
    %865 = vmatpush2.msra.mxu0 0.0
    %866 = vmatprep.subr.mxu0 0.0
    %867 = vmatpush2.msra.mxu0 0.0
    %868 = vmatprep.subr.mxu0 0.0
    %869 = vmatpush2.msra.mxu0 0.0
    %870 = vmatprep.mubr.f32.mxu0 0.0
    %871 = vmatmul.mubr.f32.gmra.mxu0 %v52
    %v872 = vpop.f32.mrf.mxu0
    %v873 = vadd.f32 0.0, %v872
    %v874 = vpop.f32.mrf.mxu0
    %v875 = vadd.f32 0.0, %v874
    %876 = vdwg.mxu0
    %v877 = vld [vmem:[#allocation7] sm:$0xff]
    %v878 = vld [vmem:[#allocation7 + $0x8] sm:$0xff]
    %v881 = vlaneseq
    %v882 = vshrl.u32 %v881, 7
    %v883 = vsub.s32 0, %v882
    %v884 = vrot.slane %v877, %v883
    %v885 = vlaneseq
    %v886 = vshrl.u32 %v885, 7
    %v887 = vsub.s32 1, %v886
    %v888 = vrot.slane %v877, %v887
    %v889 = vlaneseq
    %v890 = vshrl.u32 %v889, 7
    %v891 = vsub.s32 2, %v890
    %v892 = vrot.slane %v877, %v891
    %v893 = vlaneseq
    %v894 = vshrl.u32 %v893, 7
    %v895 = vsub.s32 3, %v894
    %v896 = vrot.slane %v877, %v895
    %v897 = vlaneseq
    %v898 = vshrl.u32 %v897, 7
    %v899 = vsub.s32 4, %v898
    %v900 = vrot.slane %v877, %v899
    %v901 = vlaneseq
    %v902 = vshrl.u32 %v901, 7
    %v903 = vsub.s32 5, %v902
    %v904 = vrot.slane %v877, %v903
    %v905 = vlaneseq
    %v906 = vshrl.u32 %v905, 7
    %v907 = vsub.s32 6, %v906
    %v908 = vrot.slane %v877, %v907
    %v909 = vlaneseq
    %v910 = vshrl.u32 %v909, 7
    %v911 = vsub.s32 7, %v910
    %v912 = vrot.slane %v877, %v911
    %v913 = vlaneseq
    %v914 = vshrl.u32 %v913, 7
    %v915 = vsub.s32 0, %v914
    %v916 = vrot.slane %v878, %v915
    %v917 = vlaneseq
    %v918 = vshrl.u32 %v917, 7
    %v919 = vsub.s32 1, %v918
    %v920 = vrot.slane %v878, %v919
    %v921 = vlaneseq
    %v922 = vshrl.u32 %v921, 7
    %v923 = vsub.s32 2, %v922
    %v924 = vrot.slane %v878, %v923
    %v925 = vlaneseq
    %v926 = vshrl.u32 %v925, 7
    %v927 = vsub.s32 3, %v926
    %v928 = vrot.slane %v878, %v927
    %v929 = vlaneseq
    %v930 = vshrl.u32 %v929, 7
    %v931 = vsub.s32 4, %v930
    %v932 = vrot.slane %v878, %v931
    %v933 = vlaneseq
    %v934 = vshrl.u32 %v933, 7
    %v935 = vsub.s32 5, %v934
    %v936 = vrot.slane %v878, %v935
    %v937 = vlaneseq
    %v938 = vshrl.u32 %v937, 7
    %v939 = vsub.s32 6, %v938
    %v940 = vrot.slane %v878, %v939
    %v941 = vlaneseq
    %v942 = vshrl.u32 %v941, 7
    %v943 = vsub.s32 7, %v942
    %v944 = vrot.slane %v878, %v943
    %v961 = vsub.f32 %v376, %v884
    %v962 = vsub.f32 %v378, %v888
    %v963 = vsub.f32 %v447, %v892
    %v964 = vsub.f32 %v449, %v896
    %v965 = vsub.f32 %v518, %v900
    %v966 = vsub.f32 %v520, %v904
    %v967 = vsub.f32 %v589, %v908
    %v968 = vsub.f32 %v591, %v912
    %v969 = vsub.f32 %v660, %v916
    %v970 = vsub.f32 %v662, %v920
    %v971 = vsub.f32 %v731, %v924
    %v972 = vsub.f32 %v733, %v928
    %v973 = vsub.f32 %v802, %v932
    %v974 = vsub.f32 %v804, %v936
    %v975 = vsub.f32 %v873, %v940
    %v976 = vsub.f32 %v875, %v944
    %v977 = vand.u32 2147483647, %v961
    %vm978 = vcmp.le.f32.partialorder %v977, 0.7853982
    %vm979 = vcmp.lt.s32.totalorder %v961, 0
    %v980 = vand.u32 %v961, 2139095040
    %v981 = vshrl.u32 %v980, 23
    %v982 = vsub.s32 %v981, 127
    %v983 = vand.u32 2147483647, %v961
    %v984 = vand.u32 %v983, 8388607
    %v985 = vor.u32 %v984, 8388608
    %v986 = vsub.s32 0, %v985
    %v987 = vadd.s32 %v982, 1
    %vm988 = vcmp.gt.s32.totalorder %v987, 0
    %v989 = vsel %vm988, %v987, 0
    %v990 = vshrl.u32 %v989, 5
    %v991 = vand.u32 %v989, 31
    %v992 = vsub.s32 32, %v991
    %v993 = vshrl.u32 683565275, %v992
    %v994 = vshll.u32 683565275, %v991
    %v995 = vshrl.u32 2475754826, %v992
    %v996 = vor.u32 %v994, %v995
    %v997 = vshll.u32 2475754826, %v991
    %v998 = vshrl.u32 2131351028, %v992
    %v999 = vor.u32 %v997, %v998
    %v1000 = vshll.u32 2131351028, %v991
    %v1001 = vshrl.u32 2102212464, %v992
    %v1002 = vor.u32 %v1000, %v1001
    %v1003 = vshll.u32 2102212464, %v991
    %v1004 = vshrl.u32 920167782, %v992
    %v1005 = vor.u32 %v1003, %v1004
    %v1006 = vshll.u32 920167782, %v991
    %v1007 = vshrl.u32 1326507024, %v992
    %v1008 = vor.u32 %v1006, %v1007
    %vm1009 = vcmp.lt.s32.totalorder %v990, 1
    %vm1010 = vcmp.lt.s32.totalorder %v990, 2
    %vm1011 = vcmp.lt.s32.totalorder %v990, 3
    %vm1012 = vcmp.lt.s32.totalorder %v990, 4
    %v1013 = vsel %vm1009, %v993, %v996
    %v1014 = vsel %vm1012, %v1002, 2102212464
    %v1015 = vsel %vm1011, %v999, %v1014
    %v1016 = vsel %vm1010, %v1013, %v1015
    %v1017 = vsel %vm1009, %v996, %v999
    %v1018 = vsel %vm1012, %v1005, 920167782
    %v1019 = vsel %vm1011, %v1002, %v1018
    %v1020 = vsel %vm1010, %v1017, %v1019
    %v1021 = vsel %vm1009, %v999, %v1002
    %v1022 = vsel %vm1012, %v1008, 1326507024
    %v1023 = vsel %vm1011, %v1005, %v1022
    %v1024 = vsel %vm1010, %v1021, %v1023
    %v1025 = vshll.u32 %v985, 8
    %v1026 = vmul.u32.u64.compose %v1025, %v1024
    %v1027 = vextract.low.u32 %v1026
    %v1028 = vextract.high.u32 %v1026
    %v1029 = vmul.u32.u64.compose %v1025, %v1020
    %v1030 = vextract.low.u32 %v1029
    %v1031 = vextract.high.u32 %v1029
    %v1032 = vmul.u32 %v1025, %v1016
    %v1033 = vadd.s32 %v1028, %v1030
    %vm1034 = vc.u32 %v1028, %v1030
    %v1035 = vadd.s32 %v1031, 1
    %v1036 = vsel %vm1034, %v1035, %v1031
    %v1037 = vadd.s32 %v1032, %v1036
    %v1038 = vadd.s32 %v1037, 536870912
    %v1039 = vshrl.u32 %v1038, 30
    %v1040 = vshll.u32 %v1039, 30
    %v1041 = vsub.s32 %v1037, %v1040
    %vm1042 = vcmp.lt.s32.totalorder %v1041, 0
    %v1043 = vsub.s32 0, %v1041
    %v1044 = vsel %vm1042, %v1043, %v1041
    %v1045 = vclz %v1044
    %v1046 = vsub.s32 %v1045, 2
    %vm1047 = vcmp.gt.s32.totalorder 0, %v1046
    %v1048 = vsel %vm1047, 0, %v1046
    %v1049 = vsub.s32 32, %v1048
    %v1050 = vshll.u32 %v1041, %v1048
    %v1051 = vshrl.u32 %v1033, %v1049
    %v1052 = vor.u32 %v1050, %v1051
    %v1053 = vsub.s32 4294967266, %v1048
    %v1054 = vadd.s32 %v1053, 127
    %v1055 = vshll.u32 %v1054, 23
    %v1056 = vor.u32 4788187, %v1055
    %v1057 = vand.u32 2147483647, %v1056
    %v1059 = vcvt.s32.f32 %v1052
    %v1060 = vmul.f32 %v1059, %v1057
    %v1061 = vxor.u32 %v1060, 2147483648
    %v1062 = vsel %vm979, %v1061, %v1060
    %v1063 = vsub.s32 4, %v1039
    %v1064 = vsel %vm979, %v1063, %v1039
    %v1065 = vsel %vm978, %v961, %v1062
    %v1066 = vsel %vm978, 0, %v1064
    %v1067 = vcosq.f32.pop %v1065
    %v1068 = vsinq.f32.pop %v1065
    %vm1069 = vweird.f32 %v961
    %v1070 = vand.u32 %v1066, 3
    %vm1071 = vcmp.lt.s32.totalorder %v1070, 2
    %vm1072 = vcmp.eq.s32.totalorder %v1070, 0
    %v1073 = vxor.u32 %v1068, 2147483648
    %v1074 = vsel %vm1072, %v1067, %v1073
    %vm1075 = vcmp.eq.s32.totalorder %v1070, 2
    %v1076 = vxor.u32 %v1067, 2147483648
    %v1077 = vsel %vm1075, %v1076, %v1068
    %v1078 = vsel %vm1071, %v1074, %v1077
    %v1079 = vsel %vm1069, nan, %v1078
    %v1080 = vand.u32 2147483647, %v962
    %vm1081 = vcmp.le.f32.partialorder %v1080, 0.7853982
    %vm1082 = vcmp.lt.s32.totalorder %v962, 0
    %v1083 = vand.u32 %v962, 2139095040
    %v1084 = vshrl.u32 %v1083, 23
    %v1085 = vsub.s32 %v1084, 127
    %v1086 = vand.u32 2147483647, %v962
    %v1087 = vand.u32 %v1086, 8388607
    %v1088 = vor.u32 %v1087, 8388608
    %v1089 = vsub.s32 0, %v1088
    %v1090 = vadd.s32 %v1085, 1
    %vm1091 = vcmp.gt.s32.totalorder %v1090, 0
    %v1092 = vsel %vm1091, %v1090, 0
    %v1093 = vshrl.u32 %v1092, 5
    %v1094 = vand.u32 %v1092, 31
    %v1095 = vsub.s32 32, %v1094
    %v1096 = vshrl.u32 683565275, %v1095
    %v1097 = vshll.u32 683565275, %v1094
    %v1098 = vshrl.u32 2475754826, %v1095
    %v1099 = vor.u32 %v1097, %v1098
    %v1100 = vshll.u32 2475754826, %v1094
    %v1101 = vshrl.u32 2131351028, %v1095
    %v1102 = vor.u32 %v1100, %v1101
    %v1103 = vshll.u32 2131351028, %v1094
    %v1104 = vshrl.u32 2102212464, %v1095
    %v1105 = vor.u32 %v1103, %v1104
    %v1106 = vshll.u32 2102212464, %v1094
    %v1107 = vshrl.u32 920167782, %v1095
    %v1108 = vor.u32 %v1106, %v1107
    %v1109 = vshll.u32 920167782, %v1094
    %v1110 = vshrl.u32 1326507024, %v1095
    %v1111 = vor.u32 %v1109, %v1110
    %vm1112 = vcmp.lt.s32.totalorder %v1093, 1
    %vm1113 = vcmp.lt.s32.totalorder %v1093, 2
    %vm1114 = vcmp.lt.s32.totalorder %v1093, 3
    %vm1115 = vcmp.lt.s32.totalorder %v1093, 4
    %v1116 = vsel %vm1112, %v1096, %v1099
    %v1117 = vsel %vm1115, %v1105, 2102212464
    %v1118 = vsel %vm1114, %v1102, %v1117
    %v1119 = vsel %vm1113, %v1116, %v1118
    %v1120 = vsel %vm1112, %v1099, %v1102
    %v1121 = vsel %vm1115, %v1108, 920167782
    %v1122 = vsel %vm1114, %v1105, %v1121
    %v1123 = vsel %vm1113, %v1120, %v1122
    %v1124 = vsel %vm1112, %v1102, %v1105
    %v1125 = vsel %vm1115, %v1111, 1326507024
    %v1126 = vsel %vm1114, %v1108, %v1125
    %v1127 = vsel %vm1113, %v1124, %v1126
    %v1128 = vshll.u32 %v1088, 8
    %v1129 = vmul.u32.u64.compose %v1128, %v1127
    %v1130 = vextract.low.u32 %v1129
    %v1131 = vextract.high.u32 %v1129
    %v1132 = vmul.u32.u64.compose %v1128, %v1123
    %v1133 = vextract.low.u32 %v1132
    %v1134 = vextract.high.u32 %v1132
    %v1135 = vmul.u32 %v1128, %v1119
    %v1136 = vadd.s32 %v1131, %v1133
    %vm1137 = vc.u32 %v1131, %v1133
    %v1138 = vadd.s32 %v1134, 1
    %v1139 = vsel %vm1137, %v1138, %v1134
    %v1140 = vadd.s32 %v1135, %v1139
    %v1141 = vadd.s32 %v1140, 536870912
    %v1142 = vshrl.u32 %v1141, 30
    %v1143 = vshll.u32 %v1142, 30
    %v1144 = vsub.s32 %v1140, %v1143
    %vm1145 = vcmp.lt.s32.totalorder %v1144, 0
    %v1146 = vsub.s32 0, %v1144
    %v1147 = vsel %vm1145, %v1146, %v1144
    %v1148 = vclz %v1147
    %v1149 = vsub.s32 %v1148, 2
    %vm1150 = vcmp.gt.s32.totalorder 0, %v1149
    %v1151 = vsel %vm1150, 0, %v1149
    %v1152 = vsub.s32 32, %v1151
    %v1153 = vshll.u32 %v1144, %v1151
    %v1154 = vshrl.u32 %v1136, %v1152
    %v1155 = vor.u32 %v1153, %v1154
    %v1156 = vsub.s32 4294967266, %v1151
    %v1157 = vadd.s32 %v1156, 127
    %v1158 = vshll.u32 %v1157, 23
    %v1159 = vor.u32 4788187, %v1158
    %v1160 = vand.u32 2147483647, %v1159
    %v1162 = vcvt.s32.f32 %v1155
    %v1163 = vmul.f32 %v1162, %v1160
    %v1164 = vxor.u32 %v1163, 2147483648
    %v1165 = vsel %vm1082, %v1164, %v1163
    %v1166 = vsub.s32 4, %v1142
    %v1167 = vsel %vm1082, %v1166, %v1142
    %v1168 = vsel %vm1081, %v962, %v1165
    %v1169 = vsel %vm1081, 0, %v1167
    %v1170 = vcosq.f32.pop %v1168
    %v1171 = vsinq.f32.pop %v1168
    %vm1172 = vweird.f32 %v962
    %v1173 = vand.u32 %v1169, 3
    %vm1174 = vcmp.lt.s32.totalorder %v1173, 2
    %vm1175 = vcmp.eq.s32.totalorder %v1173, 0
    %v1176 = vxor.u32 %v1171, 2147483648
    %v1177 = vsel %vm1175, %v1170, %v1176
    %vm1178 = vcmp.eq.s32.totalorder %v1173, 2
    %v1179 = vxor.u32 %v1170, 2147483648
    %v1180 = vsel %vm1178, %v1179, %v1171
    %v1181 = vsel %vm1174, %v1177, %v1180
    %v1182 = vsel %vm1172, nan, %v1181
    %v1183 = vand.u32 2147483647, %v963
    %vm1184 = vcmp.le.f32.partialorder %v1183, 0.7853982
    %vm1185 = vcmp.lt.s32.totalorder %v963, 0
    %v1186 = vand.u32 %v963, 2139095040
    %v1187 = vshrl.u32 %v1186, 23
    %v1188 = vsub.s32 %v1187, 127
    %v1189 = vand.u32 2147483647, %v963
    %v1190 = vand.u32 %v1189, 8388607
    %v1191 = vor.u32 %v1190, 8388608
    %v1192 = vsub.s32 0, %v1191
    %v1193 = vadd.s32 %v1188, 1
    %vm1194 = vcmp.gt.s32.totalorder %v1193, 0
    %v1195 = vsel %vm1194, %v1193, 0
    %v1196 = vshrl.u32 %v1195, 5
    %v1197 = vand.u32 %v1195, 31
    %v1198 = vsub.s32 32, %v1197
    %v1199 = vshrl.u32 683565275, %v1198
    %v1200 = vshll.u32 683565275, %v1197
    %v1201 = vshrl.u32 2475754826, %v1198
    %v1202 = vor.u32 %v1200, %v1201
    %v1203 = vshll.u32 2475754826, %v1197
    %v1204 = vshrl.u32 2131351028, %v1198
    %v1205 = vor.u32 %v1203, %v1204
    %v1206 = vshll.u32 2131351028, %v1197
    %v1207 = vshrl.u32 2102212464, %v1198
    %v1208 = vor.u32 %v1206, %v1207
    %v1209 = vshll.u32 2102212464, %v1197
    %v1210 = vshrl.u32 920167782, %v1198
    %v1211 = vor.u32 %v1209, %v1210
    %v1212 = vshll.u32 920167782, %v1197
    %v1213 = vshrl.u32 1326507024, %v1198
    %v1214 = vor.u32 %v1212, %v1213
    %vm1215 = vcmp.lt.s32.totalorder %v1196, 1
    %vm1216 = vcmp.lt.s32.totalorder %v1196, 2
    %vm1217 = vcmp.lt.s32.totalorder %v1196, 3
    %vm1218 = vcmp.lt.s32.totalorder %v1196, 4
    %v1219 = vsel %vm1215, %v1199, %v1202
    %v1220 = vsel %vm1218, %v1208, 2102212464
    %v1221 = vsel %vm1217, %v1205, %v1220
    %v1222 = vsel %vm1216, %v1219, %v1221
    %v1223 = vsel %vm1215, %v1202, %v1205
    %v1224 = vsel %vm1218, %v1211, 920167782
    %v1225 = vsel %vm1217, %v1208, %v1224
    %v1226 = vsel %vm1216, %v1223, %v1225
    %v1227 = vsel %vm1215, %v1205, %v1208
    %v1228 = vsel %vm1218, %v1214, 1326507024
    %v1229 = vsel %vm1217, %v1211, %v1228
    %v1230 = vsel %vm1216, %v1227, %v1229
    %v1231 = vshll.u32 %v1191, 8
    %v1232 = vmul.u32.u64.compose %v1231, %v1230
    %v1233 = vextract.low.u32 %v1232
    %v1234 = vextract.high.u32 %v1232
    %v1235 = vmul.u32.u64.compose %v1231, %v1226
    %v1236 = vextract.low.u32 %v1235
    %v1237 = vextract.high.u32 %v1235
    %v1238 = vmul.u32 %v1231, %v1222
    %v1239 = vadd.s32 %v1234, %v1236
    %vm1240 = vc.u32 %v1234, %v1236
    %v1241 = vadd.s32 %v1237, 1
    %v1242 = vsel %vm1240, %v1241, %v1237
    %v1243 = vadd.s32 %v1238, %v1242
    %v1244 = vadd.s32 %v1243, 536870912
    %v1245 = vshrl.u32 %v1244, 30
    %v1246 = vshll.u32 %v1245, 30
    %v1247 = vsub.s32 %v1243, %v1246
    %vm1248 = vcmp.lt.s32.totalorder %v1247, 0
    %v1249 = vsub.s32 0, %v1247
    %v1250 = vsel %vm1248, %v1249, %v1247
    %v1251 = vclz %v1250
    %v1252 = vsub.s32 %v1251, 2
    %vm1253 = vcmp.gt.s32.totalorder 0, %v1252
    %v1254 = vsel %vm1253, 0, %v1252
    %v1255 = vsub.s32 32, %v1254
    %v1256 = vshll.u32 %v1247, %v1254
    %v1257 = vshrl.u32 %v1239, %v1255
    %v1258 = vor.u32 %v1256, %v1257
    %v1259 = vsub.s32 4294967266, %v1254
    %v1260 = vadd.s32 %v1259, 127
    %v1261 = vshll.u32 %v1260, 23
    %v1262 = vor.u32 4788187, %v1261
    %v1263 = vand.u32 2147483647, %v1262
    %v1265 = vcvt.s32.f32 %v1258
    %v1266 = vmul.f32 %v1265, %v1263
    %v1267 = vxor.u32 %v1266, 2147483648
    %v1268 = vsel %vm1185, %v1267, %v1266
    %v1269 = vsub.s32 4, %v1245
    %v1270 = vsel %vm1185, %v1269, %v1245
    %v1271 = vsel %vm1184, %v963, %v1268
    %v1272 = vsel %vm1184, 0, %v1270
    %v1273 = vcosq.f32.pop %v1271
    %v1274 = vsinq.f32.pop %v1271
    %vm1275 = vweird.f32 %v963
    %v1276 = vand.u32 %v1272, 3
    %vm1277 = vcmp.lt.s32.totalorder %v1276, 2
    %vm1278 = vcmp.eq.s32.totalorder %v1276, 0
    %v1279 = vxor.u32 %v1274, 2147483648
    %v1280 = vsel %vm1278, %v1273, %v1279
    %vm1281 = vcmp.eq.s32.totalorder %v1276, 2
    %v1282 = vxor.u32 %v1273, 2147483648
    %v1283 = vsel %vm1281, %v1282, %v1274
    %v1284 = vsel %vm1277, %v1280, %v1283
    %v1285 = vsel %vm1275, nan, %v1284
    %v1286 = vand.u32 2147483647, %v964
    %vm1287 = vcmp.le.f32.partialorder %v1286, 0.7853982
    %vm1288 = vcmp.lt.s32.totalorder %v964, 0
    %v1289 = vand.u32 %v964, 2139095040
    %v1290 = vshrl.u32 %v1289, 23
    %v1291 = vsub.s32 %v1290, 127
    %v1292 = vand.u32 2147483647, %v964
    %v1293 = vand.u32 %v1292, 8388607
    %v1294 = vor.u32 %v1293, 8388608
    %v1295 = vsub.s32 0, %v1294
    %v1296 = vadd.s32 %v1291, 1
    %vm1297 = vcmp.gt.s32.totalorder %v1296, 0
    %v1298 = vsel %vm1297, %v1296, 0
    %v1299 = vshrl.u32 %v1298, 5
    %v1300 = vand.u32 %v1298, 31
    %v1301 = vsub.s32 32, %v1300
    %v1302 = vshrl.u32 683565275, %v1301
    %v1303 = vshll.u32 683565275, %v1300
    %v1304 = vshrl.u32 2475754826, %v1301
    %v1305 = vor.u32 %v1303, %v1304
    %v1306 = vshll.u32 2475754826, %v1300
    %v1307 = vshrl.u32 2131351028, %v1301
    %v1308 = vor.u32 %v1306, %v1307
    %v1309 = vshll.u32 2131351028, %v1300
    %v1310 = vshrl.u32 2102212464, %v1301
    %v1311 = vor.u32 %v1309, %v1310
    %v1312 = vshll.u32 2102212464, %v1300
    %v1313 = vshrl.u32 920167782, %v1301
    %v1314 = vor.u32 %v1312, %v1313
    %v1315 = vshll.u32 920167782, %v1300
    %v1316 = vshrl.u32 1326507024, %v1301
    %v1317 = vor.u32 %v1315, %v1316
    %vm1318 = vcmp.lt.s32.totalorder %v1299, 1
    %vm1319 = vcmp.lt.s32.totalorder %v1299, 2
    %vm1320 = vcmp.lt.s32.totalorder %v1299, 3
    %vm1321 = vcmp.lt.s32.totalorder %v1299, 4
    %v1322 = vsel %vm1318, %v1302, %v1305
    %v1323 = vsel %vm1321, %v1311, 2102212464
    %v1324 = vsel %vm1320, %v1308, %v1323
    %v1325 = vsel %vm1319, %v1322, %v1324
    %v1326 = vsel %vm1318, %v1305, %v1308
    %v1327 = vsel %vm1321, %v1314, 920167782
    %v1328 = vsel %vm1320, %v1311, %v1327
    %v1329 = vsel %vm1319, %v1326, %v1328
    %v1330 = vsel %vm1318, %v1308, %v1311
    %v1331 = vsel %vm1321, %v1317, 1326507024
    %v1332 = vsel %vm1320, %v1314, %v1331
    %v1333 = vsel %vm1319, %v1330, %v1332
    %v1334 = vshll.u32 %v1294, 8
    %v1335 = vmul.u32.u64.compose %v1334, %v1333
    %v1336 = vextract.low.u32 %v1335
    %v1337 = vextract.high.u32 %v1335
    %v1338 = vmul.u32.u64.compose %v1334, %v1329
    %v1339 = vextract.low.u32 %v1338
    %v1340 = vextract.high.u32 %v1338
    %v1341 = vmul.u32 %v1334, %v1325
    %v1342 = vadd.s32 %v1337, %v1339
    %vm1343 = vc.u32 %v1337, %v1339
    %v1344 = vadd.s32 %v1340, 1
    %v1345 = vsel %vm1343, %v1344, %v1340
    %v1346 = vadd.s32 %v1341, %v1345
    %v1347 = vadd.s32 %v1346, 536870912
    %v1348 = vshrl.u32 %v1347, 30
    %v1349 = vshll.u32 %v1348, 30
    %v1350 = vsub.s32 %v1346, %v1349
    %vm1351 = vcmp.lt.s32.totalorder %v1350, 0
    %v1352 = vsub.s32 0, %v1350
    %v1353 = vsel %vm1351, %v1352, %v1350
    %v1354 = vclz %v1353
    %v1355 = vsub.s32 %v1354, 2
    %vm1356 = vcmp.gt.s32.totalorder 0, %v1355
    %v1357 = vsel %vm1356, 0, %v1355
    %v1358 = vsub.s32 32, %v1357
    %v1359 = vshll.u32 %v1350, %v1357
    %v1360 = vshrl.u32 %v1342, %v1358
    %v1361 = vor.u32 %v1359, %v1360
    %v1362 = vsub.s32 4294967266, %v1357
    %v1363 = vadd.s32 %v1362, 127
    %v1364 = vshll.u32 %v1363, 23
    %v1365 = vor.u32 4788187, %v1364
    %v1366 = vand.u32 2147483647, %v1365
    %v1368 = vcvt.s32.f32 %v1361
    %v1369 = vmul.f32 %v1368, %v1366
    %v1370 = vxor.u32 %v1369, 2147483648
    %v1371 = vsel %vm1288, %v1370, %v1369
    %v1372 = vsub.s32 4, %v1348
    %v1373 = vsel %vm1288, %v1372, %v1348
    %v1374 = vsel %vm1287, %v964, %v1371
    %v1375 = vsel %vm1287, 0, %v1373
    %v1376 = vcosq.f32.pop %v1374
    %v1377 = vsinq.f32.pop %v1374
    %vm1378 = vweird.f32 %v964
    %v1379 = vand.u32 %v1375, 3
    %vm1380 = vcmp.lt.s32.totalorder %v1379, 2
    %vm1381 = vcmp.eq.s32.totalorder %v1379, 0
    %v1382 = vxor.u32 %v1377, 2147483648
    %v1383 = vsel %vm1381, %v1376, %v1382
    %vm1384 = vcmp.eq.s32.totalorder %v1379, 2
    %v1385 = vxor.u32 %v1376, 2147483648
    %v1386 = vsel %vm1384, %v1385, %v1377
    %v1387 = vsel %vm1380, %v1383, %v1386
    %v1388 = vsel %vm1378, nan, %v1387
    %v1389 = vand.u32 2147483647, %v965
    %vm1390 = vcmp.le.f32.partialorder %v1389, 0.7853982
    %vm1391 = vcmp.lt.s32.totalorder %v965, 0
    %v1392 = vand.u32 %v965, 2139095040
    %v1393 = vshrl.u32 %v1392, 23
    %v1394 = vsub.s32 %v1393, 127
    %v1395 = vand.u32 2147483647, %v965
    %v1396 = vand.u32 %v1395, 8388607
    %v1397 = vor.u32 %v1396, 8388608
    %v1398 = vsub.s32 0, %v1397
    %v1399 = vadd.s32 %v1394, 1
    %vm1400 = vcmp.gt.s32.totalorder %v1399, 0
    %v1401 = vsel %vm1400, %v1399, 0
    %v1402 = vshrl.u32 %v1401, 5
    %v1403 = vand.u32 %v1401, 31
    %v1404 = vsub.s32 32, %v1403
    %v1405 = vshrl.u32 683565275, %v1404
    %v1406 = vshll.u32 683565275, %v1403
    %v1407 = vshrl.u32 2475754826, %v1404
    %v1408 = vor.u32 %v1406, %v1407
    %v1409 = vshll.u32 2475754826, %v1403
    %v1410 = vshrl.u32 2131351028, %v1404
    %v1411 = vor.u32 %v1409, %v1410
    %v1412 = vshll.u32 2131351028, %v1403
    %v1413 = vshrl.u32 2102212464, %v1404
    %v1414 = vor.u32 %v1412, %v1413
    %v1415 = vshll.u32 2102212464, %v1403
    %v1416 = vshrl.u32 920167782, %v1404
    %v1417 = vor.u32 %v1415, %v1416
    %v1418 = vshll.u32 920167782, %v1403
    %v1419 = vshrl.u32 1326507024, %v1404
    %v1420 = vor.u32 %v1418, %v1419
    %vm1421 = vcmp.lt.s32.totalorder %v1402, 1
    %vm1422 = vcmp.lt.s32.totalorder %v1402, 2
    %vm1423 = vcmp.lt.s32.totalorder %v1402, 3
    %vm1424 = vcmp.lt.s32.totalorder %v1402, 4
    %v1425 = vsel %vm1421, %v1405, %v1408
    %v1426 = vsel %vm1424, %v1414, 2102212464
    %v1427 = vsel %vm1423, %v1411, %v1426
    %v1428 = vsel %vm1422, %v1425, %v1427
    %v1429 = vsel %vm1421, %v1408, %v1411
    %v1430 = vsel %vm1424, %v1417, 920167782
    %v1431 = vsel %vm1423, %v1414, %v1430
    %v1432 = vsel %vm1422, %v1429, %v1431
    %v1433 = vsel %vm1421, %v1411, %v1414
    %v1434 = vsel %vm1424, %v1420, 1326507024
    %v1435 = vsel %vm1423, %v1417, %v1434
    %v1436 = vsel %vm1422, %v1433, %v1435
    %v1437 = vshll.u32 %v1397, 8
    %v1438 = vmul.u32.u64.compose %v1437, %v1436
    %v1439 = vextract.low.u32 %v1438
    %v1440 = vextract.high.u32 %v1438
    %v1441 = vmul.u32.u64.compose %v1437, %v1432
    %v1442 = vextract.low.u32 %v1441
    %v1443 = vextract.high.u32 %v1441
    %v1444 = vmul.u32 %v1437, %v1428
    %v1445 = vadd.s32 %v1440, %v1442
    %vm1446 = vc.u32 %v1440, %v1442
    %v1447 = vadd.s32 %v1443, 1
    %v1448 = vsel %vm1446, %v1447, %v1443
    %v1449 = vadd.s32 %v1444, %v1448
    %v1450 = vadd.s32 %v1449, 536870912
    %v1451 = vshrl.u32 %v1450, 30
    %v1452 = vshll.u32 %v1451, 30
    %v1453 = vsub.s32 %v1449, %v1452
    %vm1454 = vcmp.lt.s32.totalorder %v1453, 0
    %v1455 = vsub.s32 0, %v1453
    %v1456 = vsel %vm1454, %v1455, %v1453
    %v1457 = vclz %v1456
    %v1458 = vsub.s32 %v1457, 2
    %vm1459 = vcmp.gt.s32.totalorder 0, %v1458
    %v1460 = vsel %vm1459, 0, %v1458
    %v1461 = vsub.s32 32, %v1460
    %v1462 = vshll.u32 %v1453, %v1460
    %v1463 = vshrl.u32 %v1445, %v1461
    %v1464 = vor.u32 %v1462, %v1463
    %v1465 = vsub.s32 4294967266, %v1460
    %v1466 = vadd.s32 %v1465, 127
    %v1467 = vshll.u32 %v1466, 23
    %v1468 = vor.u32 4788187, %v1467
    %v1469 = vand.u32 2147483647, %v1468
    %v1471 = vcvt.s32.f32 %v1464
    %v1472 = vmul.f32 %v1471, %v1469
    %v1473 = vxor.u32 %v1472, 2147483648
    %v1474 = vsel %vm1391, %v1473, %v1472
    %v1475 = vsub.s32 4, %v1451
    %v1476 = vsel %vm1391, %v1475, %v1451
    %v1477 = vsel %vm1390, %v965, %v1474
    %v1478 = vsel %vm1390, 0, %v1476
    %v1479 = vcosq.f32.pop %v1477
    %v1480 = vsinq.f32.pop %v1477
    %vm1481 = vweird.f32 %v965
    %v1482 = vand.u32 %v1478, 3
    %vm1483 = vcmp.lt.s32.totalorder %v1482, 2
    %vm1484 = vcmp.eq.s32.totalorder %v1482, 0
    %v1485 = vxor.u32 %v1480, 2147483648
    %v1486 = vsel %vm1484, %v1479, %v1485
    %vm1487 = vcmp.eq.s32.totalorder %v1482, 2
    %v1488 = vxor.u32 %v1479, 2147483648
    %v1489 = vsel %vm1487, %v1488, %v1480
    %v1490 = vsel %vm1483, %v1486, %v1489
    %v1491 = vsel %vm1481, nan, %v1490
    %v1492 = vand.u32 2147483647, %v966
    %vm1493 = vcmp.le.f32.partialorder %v1492, 0.7853982
    %vm1494 = vcmp.lt.s32.totalorder %v966, 0
    %v1495 = vand.u32 %v966, 2139095040
    %v1496 = vshrl.u32 %v1495, 23
    %v1497 = vsub.s32 %v1496, 127
    %v1498 = vand.u32 2147483647, %v966
    %v1499 = vand.u32 %v1498, 8388607
    %v1500 = vor.u32 %v1499, 8388608
    %v1501 = vsub.s32 0, %v1500
    %v1502 = vadd.s32 %v1497, 1
    %vm1503 = vcmp.gt.s32.totalorder %v1502, 0
    %v1504 = vsel %vm1503, %v1502, 0
    %v1505 = vshrl.u32 %v1504, 5
    %v1506 = vand.u32 %v1504, 31
    %v1507 = vsub.s32 32, %v1506
    %v1508 = vshrl.u32 683565275, %v1507
    %v1509 = vshll.u32 683565275, %v1506
    %v1510 = vshrl.u32 2475754826, %v1507
    %v1511 = vor.u32 %v1509, %v1510
    %v1512 = vshll.u32 2475754826, %v1506
    %v1513 = vshrl.u32 2131351028, %v1507
    %v1514 = vor.u32 %v1512, %v1513
    %v1515 = vshll.u32 2131351028, %v1506
    %v1516 = vshrl.u32 2102212464, %v1507
    %v1517 = vor.u32 %v1515, %v1516
    %v1518 = vshll.u32 2102212464, %v1506
    %v1519 = vshrl.u32 920167782, %v1507
    %v1520 = vor.u32 %v1518, %v1519
    %v1521 = vshll.u32 920167782, %v1506
    %v1522 = vshrl.u32 1326507024, %v1507
    %v1523 = vor.u32 %v1521, %v1522
    %vm1524 = vcmp.lt.s32.totalorder %v1505, 1
    %vm1525 = vcmp.lt.s32.totalorder %v1505, 2
    %vm1526 = vcmp.lt.s32.totalorder %v1505, 3
    %vm1527 = vcmp.lt.s32.totalorder %v1505, 4
    %v1528 = vsel %vm1524, %v1508, %v1511
    %v1529 = vsel %vm1527, %v1517, 2102212464
    %v1530 = vsel %vm1526, %v1514, %v1529
    %v1531 = vsel %vm1525, %v1528, %v1530
    %v1532 = vsel %vm1524, %v1511, %v1514
    %v1533 = vsel %vm1527, %v1520, 920167782
    %v1534 = vsel %vm1526, %v1517, %v1533
    %v1535 = vsel %vm1525, %v1532, %v1534
    %v1536 = vsel %vm1524, %v1514, %v1517
    %v1537 = vsel %vm1527, %v1523, 1326507024
    %v1538 = vsel %vm1526, %v1520, %v1537
    %v1539 = vsel %vm1525, %v1536, %v1538
    %v1540 = vshll.u32 %v1500, 8
    %v1541 = vmul.u32.u64.compose %v1540, %v1539
    %v1542 = vextract.low.u32 %v1541
    %v1543 = vextract.high.u32 %v1541
    %v1544 = vmul.u32.u64.compose %v1540, %v1535
    %v1545 = vextract.low.u32 %v1544
    %v1546 = vextract.high.u32 %v1544
    %v1547 = vmul.u32 %v1540, %v1531
    %v1548 = vadd.s32 %v1543, %v1545
    %vm1549 = vc.u32 %v1543, %v1545
    %v1550 = vadd.s32 %v1546, 1
    %v1551 = vsel %vm1549, %v1550, %v1546
    %v1552 = vadd.s32 %v1547, %v1551
    %v1553 = vadd.s32 %v1552, 536870912
    %v1554 = vshrl.u32 %v1553, 30
    %v1555 = vshll.u32 %v1554, 30
    %v1556 = vsub.s32 %v1552, %v1555
    %vm1557 = vcmp.lt.s32.totalorder %v1556, 0
    %v1558 = vsub.s32 0, %v1556
    %v1559 = vsel %vm1557, %v1558, %v1556
    %v1560 = vclz %v1559
    %v1561 = vsub.s32 %v1560, 2
    %vm1562 = vcmp.gt.s32.totalorder 0, %v1561
    %v1563 = vsel %vm1562, 0, %v1561
    %v1564 = vsub.s32 32, %v1563
    %v1565 = vshll.u32 %v1556, %v1563
    %v1566 = vshrl.u32 %v1548, %v1564
    %v1567 = vor.u32 %v1565, %v1566
    %v1568 = vsub.s32 4294967266, %v1563
    %v1569 = vadd.s32 %v1568, 127
    %v1570 = vshll.u32 %v1569, 23
    %v1571 = vor.u32 4788187, %v1570
    %v1572 = vand.u32 2147483647, %v1571
    %v1574 = vcvt.s32.f32 %v1567
    %v1575 = vmul.f32 %v1574, %v1572
    %v1576 = vxor.u32 %v1575, 2147483648
    %v1577 = vsel %vm1494, %v1576, %v1575
    %v1578 = vsub.s32 4, %v1554
    %v1579 = vsel %vm1494, %v1578, %v1554
    %v1580 = vsel %vm1493, %v966, %v1577
    %v1581 = vsel %vm1493, 0, %v1579
    %v1582 = vcosq.f32.pop %v1580
    %v1583 = vsinq.f32.pop %v1580
    %vm1584 = vweird.f32 %v966
    %v1585 = vand.u32 %v1581, 3
    %vm1586 = vcmp.lt.s32.totalorder %v1585, 2
    %vm1587 = vcmp.eq.s32.totalorder %v1585, 0
    %v1588 = vxor.u32 %v1583, 2147483648
    %v1589 = vsel %vm1587, %v1582, %v1588
    %vm1590 = vcmp.eq.s32.totalorder %v1585, 2
    %v1591 = vxor.u32 %v1582, 2147483648
    %v1592 = vsel %vm1590, %v1591, %v1583
    %v1593 = vsel %vm1586, %v1589, %v1592
    %v1594 = vsel %vm1584, nan, %v1593
    %v1595 = vand.u32 2147483647, %v967
    %vm1596 = vcmp.le.f32.partialorder %v1595, 0.7853982
    %vm1597 = vcmp.lt.s32.totalorder %v967, 0
    %v1598 = vand.u32 %v967, 2139095040
    %v1599 = vshrl.u32 %v1598, 23
    %v1600 = vsub.s32 %v1599, 127
    %v1601 = vand.u32 2147483647, %v967
    %v1602 = vand.u32 %v1601, 8388607
    %v1603 = vor.u32 %v1602, 8388608
    %v1604 = vsub.s32 0, %v1603
    %v1605 = vadd.s32 %v1600, 1
    %vm1606 = vcmp.gt.s32.totalorder %v1605, 0
    %v1607 = vsel %vm1606, %v1605, 0
    %v1608 = vshrl.u32 %v1607, 5
    %v1609 = vand.u32 %v1607, 31
    %v1610 = vsub.s32 32, %v1609
    %v1611 = vshrl.u32 683565275, %v1610
    %v1612 = vshll.u32 683565275, %v1609
    %v1613 = vshrl.u32 2475754826, %v1610
    %v1614 = vor.u32 %v1612, %v1613
    %v1615 = vshll.u32 2475754826, %v1609
    %v1616 = vshrl.u32 2131351028, %v1610
    %v1617 = vor.u32 %v1615, %v1616
    %v1618 = vshll.u32 2131351028, %v1609
    %v1619 = vshrl.u32 2102212464, %v1610
    %v1620 = vor.u32 %v1618, %v1619
    %v1621 = vshll.u32 2102212464, %v1609
    %v1622 = vshrl.u32 920167782, %v1610
    %v1623 = vor.u32 %v1621, %v1622
    %v1624 = vshll.u32 920167782, %v1609
    %v1625 = vshrl.u32 1326507024, %v1610
    %v1626 = vor.u32 %v1624, %v1625
    %vm1627 = vcmp.lt.s32.totalorder %v1608, 1
    %vm1628 = vcmp.lt.s32.totalorder %v1608, 2
    %vm1629 = vcmp.lt.s32.totalorder %v1608, 3
    %vm1630 = vcmp.lt.s32.totalorder %v1608, 4
    %v1631 = vsel %vm1627, %v1611, %v1614
    %v1632 = vsel %vm1630, %v1620, 2102212464
    %v1633 = vsel %vm1629, %v1617, %v1632
    %v1634 = vsel %vm1628, %v1631, %v1633
    %v1635 = vsel %vm1627, %v1614, %v1617
    %v1636 = vsel %vm1630, %v1623, 920167782
    %v1637 = vsel %vm1629, %v1620, %v1636
    %v1638 = vsel %vm1628, %v1635, %v1637
    %v1639 = vsel %vm1627, %v1617, %v1620
    %v1640 = vsel %vm1630, %v1626, 1326507024
    %v1641 = vsel %vm1629, %v1623, %v1640
    %v1642 = vsel %vm1628, %v1639, %v1641
    %v1643 = vshll.u32 %v1603, 8
    %v1644 = vmul.u32.u64.compose %v1643, %v1642
    %v1645 = vextract.low.u32 %v1644
    %v1646 = vextract.high.u32 %v1644
    %v1647 = vmul.u32.u64.compose %v1643, %v1638
    %v1648 = vextract.low.u32 %v1647
    %v1649 = vextract.high.u32 %v1647
    %v1650 = vmul.u32 %v1643, %v1634
    %v1651 = vadd.s32 %v1646, %v1648
    %vm1652 = vc.u32 %v1646, %v1648
    %v1653 = vadd.s32 %v1649, 1
    %v1654 = vsel %vm1652, %v1653, %v1649
    %v1655 = vadd.s32 %v1650, %v1654
    %v1656 = vadd.s32 %v1655, 536870912
    %v1657 = vshrl.u32 %v1656, 30
    %v1658 = vshll.u32 %v1657, 30
    %v1659 = vsub.s32 %v1655, %v1658
    %vm1660 = vcmp.lt.s32.totalorder %v1659, 0
    %v1661 = vsub.s32 0, %v1659
    %v1662 = vsel %vm1660, %v1661, %v1659
    %v1663 = vclz %v1662
    %v1664 = vsub.s32 %v1663, 2
    %vm1665 = vcmp.gt.s32.totalorder 0, %v1664
    %v1666 = vsel %vm1665, 0, %v1664
    %v1667 = vsub.s32 32, %v1666
    %v1668 = vshll.u32 %v1659, %v1666
    %v1669 = vshrl.u32 %v1651, %v1667
    %v1670 = vor.u32 %v1668, %v1669
    %v1671 = vsub.s32 4294967266, %v1666
    %v1672 = vadd.s32 %v1671, 127
    %v1673 = vshll.u32 %v1672, 23
    %v1674 = vor.u32 4788187, %v1673
    %v1675 = vand.u32 2147483647, %v1674
    %v1677 = vcvt.s32.f32 %v1670
    %v1678 = vmul.f32 %v1677, %v1675
    %v1679 = vxor.u32 %v1678, 2147483648
    %v1680 = vsel %vm1597, %v1679, %v1678
    %v1681 = vsub.s32 4, %v1657
    %v1682 = vsel %vm1597, %v1681, %v1657
    %v1683 = vsel %vm1596, %v967, %v1680
    %v1684 = vsel %vm1596, 0, %v1682
    %v1685 = vcosq.f32.pop %v1683
    %v1686 = vsinq.f32.pop %v1683
    %vm1687 = vweird.f32 %v967
    %v1688 = vand.u32 %v1684, 3
    %vm1689 = vcmp.lt.s32.totalorder %v1688, 2
    %vm1690 = vcmp.eq.s32.totalorder %v1688, 0
    %v1691 = vxor.u32 %v1686, 2147483648
    %v1692 = vsel %vm1690, %v1685, %v1691
    %vm1693 = vcmp.eq.s32.totalorder %v1688, 2
    %v1694 = vxor.u32 %v1685, 2147483648
    %v1695 = vsel %vm1693, %v1694, %v1686
    %v1696 = vsel %vm1689, %v1692, %v1695
    %v1697 = vsel %vm1687, nan, %v1696
    %v1698 = vand.u32 2147483647, %v968
    %vm1699 = vcmp.le.f32.partialorder %v1698, 0.7853982
    %vm1700 = vcmp.lt.s32.totalorder %v968, 0
    %v1701 = vand.u32 %v968, 2139095040
    %v1702 = vshrl.u32 %v1701, 23
    %v1703 = vsub.s32 %v1702, 127
    %v1704 = vand.u32 2147483647, %v968
    %v1705 = vand.u32 %v1704, 8388607
    %v1706 = vor.u32 %v1705, 8388608
    %v1707 = vsub.s32 0, %v1706
    %v1708 = vadd.s32 %v1703, 1
    %vm1709 = vcmp.gt.s32.totalorder %v1708, 0
    %v1710 = vsel %vm1709, %v1708, 0
    %v1711 = vshrl.u32 %v1710, 5
    %v1712 = vand.u32 %v1710, 31
    %v1713 = vsub.s32 32, %v1712
    %v1714 = vshrl.u32 683565275, %v1713
    %v1715 = vshll.u32 683565275, %v1712
    %v1716 = vshrl.u32 2475754826, %v1713
    %v1717 = vor.u32 %v1715, %v1716
    %v1718 = vshll.u32 2475754826, %v1712
    %v1719 = vshrl.u32 2131351028, %v1713
    %v1720 = vor.u32 %v1718, %v1719
    %v1721 = vshll.u32 2131351028, %v1712
    %v1722 = vshrl.u32 2102212464, %v1713
    %v1723 = vor.u32 %v1721, %v1722
    %v1724 = vshll.u32 2102212464, %v1712
    %v1725 = vshrl.u32 920167782, %v1713
    %v1726 = vor.u32 %v1724, %v1725
    %v1727 = vshll.u32 920167782, %v1712
    %v1728 = vshrl.u32 1326507024, %v1713
    %v1729 = vor.u32 %v1727, %v1728
    %vm1730 = vcmp.lt.s32.totalorder %v1711, 1
    %vm1731 = vcmp.lt.s32.totalorder %v1711, 2
    %vm1732 = vcmp.lt.s32.totalorder %v1711, 3
    %vm1733 = vcmp.lt.s32.totalorder %v1711, 4
    %v1734 = vsel %vm1730, %v1714, %v1717
    %v1735 = vsel %vm1733, %v1723, 2102212464
    %v1736 = vsel %vm1732, %v1720, %v1735
    %v1737 = vsel %vm1731, %v1734, %v1736
    %v1738 = vsel %vm1730, %v1717, %v1720
    %v1739 = vsel %vm1733, %v1726, 920167782
    %v1740 = vsel %vm1732, %v1723, %v1739
    %v1741 = vsel %vm1731, %v1738, %v1740
    %v1742 = vsel %vm1730, %v1720, %v1723
    %v1743 = vsel %vm1733, %v1729, 1326507024
    %v1744 = vsel %vm1732, %v1726, %v1743
    %v1745 = vsel %vm1731, %v1742, %v1744
    %v1746 = vshll.u32 %v1706, 8
    %v1747 = vmul.u32.u64.compose %v1746, %v1745
    %v1748 = vextract.low.u32 %v1747
    %v1749 = vextract.high.u32 %v1747
    %v1750 = vmul.u32.u64.compose %v1746, %v1741
    %v1751 = vextract.low.u32 %v1750
    %v1752 = vextract.high.u32 %v1750
    %v1753 = vmul.u32 %v1746, %v1737
    %v1754 = vadd.s32 %v1749, %v1751
    %vm1755 = vc.u32 %v1749, %v1751
    %v1756 = vadd.s32 %v1752, 1
    %v1757 = vsel %vm1755, %v1756, %v1752
    %v1758 = vadd.s32 %v1753, %v1757
    %v1759 = vadd.s32 %v1758, 536870912
    %v1760 = vshrl.u32 %v1759, 30
    %v1761 = vshll.u32 %v1760, 30
    %v1762 = vsub.s32 %v1758, %v1761
    %vm1763 = vcmp.lt.s32.totalorder %v1762, 0
    %v1764 = vsub.s32 0, %v1762
    %v1765 = vsel %vm1763, %v1764, %v1762
    %v1766 = vclz %v1765
    %v1767 = vsub.s32 %v1766, 2
    %vm1768 = vcmp.gt.s32.totalorder 0, %v1767
    %v1769 = vsel %vm1768, 0, %v1767
    %v1770 = vsub.s32 32, %v1769
    %v1771 = vshll.u32 %v1762, %v1769
    %v1772 = vshrl.u32 %v1754, %v1770
    %v1773 = vor.u32 %v1771, %v1772
    %v1774 = vsub.s32 4294967266, %v1769
    %v1775 = vadd.s32 %v1774, 127
    %v1776 = vshll.u32 %v1775, 23
    %v1777 = vor.u32 4788187, %v1776
    %v1778 = vand.u32 2147483647, %v1777
    %v1780 = vcvt.s32.f32 %v1773
    %v1781 = vmul.f32 %v1780, %v1778
    %v1782 = vxor.u32 %v1781, 2147483648
    %v1783 = vsel %vm1700, %v1782, %v1781
    %v1784 = vsub.s32 4, %v1760
    %v1785 = vsel %vm1700, %v1784, %v1760
    %v1786 = vsel %vm1699, %v968, %v1783
    %v1787 = vsel %vm1699, 0, %v1785
    %v1788 = vcosq.f32.pop %v1786
    %v1789 = vsinq.f32.pop %v1786
    %vm1790 = vweird.f32 %v968
    %v1791 = vand.u32 %v1787, 3
    %vm1792 = vcmp.lt.s32.totalorder %v1791, 2
    %vm1793 = vcmp.eq.s32.totalorder %v1791, 0
    %v1794 = vxor.u32 %v1789, 2147483648
    %v1795 = vsel %vm1793, %v1788, %v1794
    %vm1796 = vcmp.eq.s32.totalorder %v1791, 2
    %v1797 = vxor.u32 %v1788, 2147483648
    %v1798 = vsel %vm1796, %v1797, %v1789
    %v1799 = vsel %vm1792, %v1795, %v1798
    %v1800 = vsel %vm1790, nan, %v1799
    %v1801 = vand.u32 2147483647, %v969
    %vm1802 = vcmp.le.f32.partialorder %v1801, 0.7853982
    %vm1803 = vcmp.lt.s32.totalorder %v969, 0
    %v1804 = vand.u32 %v969, 2139095040
    %v1805 = vshrl.u32 %v1804, 23
    %v1806 = vsub.s32 %v1805, 127
    %v1807 = vand.u32 2147483647, %v969
    %v1808 = vand.u32 %v1807, 8388607
    %v1809 = vor.u32 %v1808, 8388608
    %v1810 = vsub.s32 0, %v1809
    %v1811 = vadd.s32 %v1806, 1
    %vm1812 = vcmp.gt.s32.totalorder %v1811, 0
    %v1813 = vsel %vm1812, %v1811, 0
    %v1814 = vshrl.u32 %v1813, 5
    %v1815 = vand.u32 %v1813, 31
    %v1816 = vsub.s32 32, %v1815
    %v1817 = vshrl.u32 683565275, %v1816
    %v1818 = vshll.u32 683565275, %v1815
    %v1819 = vshrl.u32 2475754826, %v1816
    %v1820 = vor.u32 %v1818, %v1819
    %v1821 = vshll.u32 2475754826, %v1815
    %v1822 = vshrl.u32 2131351028, %v1816
    %v1823 = vor.u32 %v1821, %v1822
    %v1824 = vshll.u32 2131351028, %v1815
    %v1825 = vshrl.u32 2102212464, %v1816
    %v1826 = vor.u32 %v1824, %v1825
    %v1827 = vshll.u32 2102212464, %v1815
    %v1828 = vshrl.u32 920167782, %v1816
    %v1829 = vor.u32 %v1827, %v1828
    %v1830 = vshll.u32 920167782, %v1815
    %v1831 = vshrl.u32 1326507024, %v1816
    %v1832 = vor.u32 %v1830, %v1831
    %vm1833 = vcmp.lt.s32.totalorder %v1814, 1
    %vm1834 = vcmp.lt.s32.totalorder %v1814, 2
    %vm1835 = vcmp.lt.s32.totalorder %v1814, 3
    %vm1836 = vcmp.lt.s32.totalorder %v1814, 4
    %v1837 = vsel %vm1833, %v1817, %v1820
    %v1838 = vsel %vm1836, %v1826, 2102212464
    %v1839 = vsel %vm1835, %v1823, %v1838
    %v1840 = vsel %vm1834, %v1837, %v1839
    %v1841 = vsel %vm1833, %v1820, %v1823
    %v1842 = vsel %vm1836, %v1829, 920167782
    %v1843 = vsel %vm1835, %v1826, %v1842
    %v1844 = vsel %vm1834, %v1841, %v1843
    %v1845 = vsel %vm1833, %v1823, %v1826
    %v1846 = vsel %vm1836, %v1832, 1326507024
    %v1847 = vsel %vm1835, %v1829, %v1846
    %v1848 = vsel %vm1834, %v1845, %v1847
    %v1849 = vshll.u32 %v1809, 8
    %v1850 = vmul.u32.u64.compose %v1849, %v1848
    %v1851 = vextract.low.u32 %v1850
    %v1852 = vextract.high.u32 %v1850
    %v1853 = vmul.u32.u64.compose %v1849, %v1844
    %v1854 = vextract.low.u32 %v1853
    %v1855 = vextract.high.u32 %v1853
    %v1856 = vmul.u32 %v1849, %v1840
    %v1857 = vadd.s32 %v1852, %v1854
    %vm1858 = vc.u32 %v1852, %v1854
    %v1859 = vadd.s32 %v1855, 1
    %v1860 = vsel %vm1858, %v1859, %v1855
    %v1861 = vadd.s32 %v1856, %v1860
    %v1862 = vadd.s32 %v1861, 536870912
    %v1863 = vshrl.u32 %v1862, 30
    %v1864 = vshll.u32 %v1863, 30
    %v1865 = vsub.s32 %v1861, %v1864
    %vm1866 = vcmp.lt.s32.totalorder %v1865, 0
    %v1867 = vsub.s32 0, %v1865
    %v1868 = vsel %vm1866, %v1867, %v1865
    %v1869 = vclz %v1868
    %v1870 = vsub.s32 %v1869, 2
    %vm1871 = vcmp.gt.s32.totalorder 0, %v1870
    %v1872 = vsel %vm1871, 0, %v1870
    %v1873 = vsub.s32 32, %v1872
    %v1874 = vshll.u32 %v1865, %v1872
    %v1875 = vshrl.u32 %v1857, %v1873
    %v1876 = vor.u32 %v1874, %v1875
    %v1877 = vsub.s32 4294967266, %v1872
    %v1878 = vadd.s32 %v1877, 127
    %v1879 = vshll.u32 %v1878, 23
    %v1880 = vor.u32 4788187, %v1879
    %v1881 = vand.u32 2147483647, %v1880
    %v1883 = vcvt.s32.f32 %v1876
    %v1884 = vmul.f32 %v1883, %v1881
    %v1885 = vxor.u32 %v1884, 2147483648
    %v1886 = vsel %vm1803, %v1885, %v1884
    %v1887 = vsub.s32 4, %v1863
    %v1888 = vsel %vm1803, %v1887, %v1863
    %v1889 = vsel %vm1802, %v969, %v1886
    %v1890 = vsel %vm1802, 0, %v1888
    %v1891 = vcosq.f32.pop %v1889
    %v1892 = vsinq.f32.pop %v1889
    %vm1893 = vweird.f32 %v969
    %v1894 = vand.u32 %v1890, 3
    %vm1895 = vcmp.lt.s32.totalorder %v1894, 2
    %vm1896 = vcmp.eq.s32.totalorder %v1894, 0
    %v1897 = vxor.u32 %v1892, 2147483648
    %v1898 = vsel %vm1896, %v1891, %v1897
    %vm1899 = vcmp.eq.s32.totalorder %v1894, 2
    %v1900 = vxor.u32 %v1891, 2147483648
    %v1901 = vsel %vm1899, %v1900, %v1892
    %v1902 = vsel %vm1895, %v1898, %v1901
    %v1903 = vsel %vm1893, nan, %v1902
    %v1904 = vand.u32 2147483647, %v970
    %vm1905 = vcmp.le.f32.partialorder %v1904, 0.7853982
    %vm1906 = vcmp.lt.s32.totalorder %v970, 0
    %v1907 = vand.u32 %v970, 2139095040
    %v1908 = vshrl.u32 %v1907, 23
    %v1909 = vsub.s32 %v1908, 127
    %v1910 = vand.u32 2147483647, %v970
    %v1911 = vand.u32 %v1910, 8388607
    %v1912 = vor.u32 %v1911, 8388608
    %v1913 = vsub.s32 0, %v1912
    %v1914 = vadd.s32 %v1909, 1
    %vm1915 = vcmp.gt.s32.totalorder %v1914, 0
    %v1916 = vsel %vm1915, %v1914, 0
    %v1917 = vshrl.u32 %v1916, 5
    %v1918 = vand.u32 %v1916, 31
    %v1919 = vsub.s32 32, %v1918
    %v1920 = vshrl.u32 683565275, %v1919
    %v1921 = vshll.u32 683565275, %v1918
    %v1922 = vshrl.u32 2475754826, %v1919
    %v1923 = vor.u32 %v1921, %v1922
    %v1924 = vshll.u32 2475754826, %v1918
    %v1925 = vshrl.u32 2131351028, %v1919
    %v1926 = vor.u32 %v1924, %v1925
    %v1927 = vshll.u32 2131351028, %v1918
    %v1928 = vshrl.u32 2102212464, %v1919
    %v1929 = vor.u32 %v1927, %v1928
    %v1930 = vshll.u32 2102212464, %v1918
    %v1931 = vshrl.u32 920167782, %v1919
    %v1932 = vor.u32 %v1930, %v1931
    %v1933 = vshll.u32 920167782, %v1918
    %v1934 = vshrl.u32 1326507024, %v1919
    %v1935 = vor.u32 %v1933, %v1934
    %vm1936 = vcmp.lt.s32.totalorder %v1917, 1
    %vm1937 = vcmp.lt.s32.totalorder %v1917, 2
    %vm1938 = vcmp.lt.s32.totalorder %v1917, 3
    %vm1939 = vcmp.lt.s32.totalorder %v1917, 4
    %v1940 = vsel %vm1936, %v1920, %v1923
    %v1941 = vsel %vm1939, %v1929, 2102212464
    %v1942 = vsel %vm1938, %v1926, %v1941
    %v1943 = vsel %vm1937, %v1940, %v1942
    %v1944 = vsel %vm1936, %v1923, %v1926
    %v1945 = vsel %vm1939, %v1932, 920167782
    %v1946 = vsel %vm1938, %v1929, %v1945
    %v1947 = vsel %vm1937, %v1944, %v1946
    %v1948 = vsel %vm1936, %v1926, %v1929
    %v1949 = vsel %vm1939, %v1935, 1326507024
    %v1950 = vsel %vm1938, %v1932, %v1949
    %v1951 = vsel %vm1937, %v1948, %v1950
    %v1952 = vshll.u32 %v1912, 8
    %v1953 = vmul.u32.u64.compose %v1952, %v1951
    %v1954 = vextract.low.u32 %v1953
    %v1955 = vextract.high.u32 %v1953
    %v1956 = vmul.u32.u64.compose %v1952, %v1947
    %v1957 = vextract.low.u32 %v1956
    %v1958 = vextract.high.u32 %v1956
    %v1959 = vmul.u32 %v1952, %v1943
    %v1960 = vadd.s32 %v1955, %v1957
    %vm1961 = vc.u32 %v1955, %v1957
    %v1962 = vadd.s32 %v1958, 1
    %v1963 = vsel %vm1961, %v1962, %v1958
    %v1964 = vadd.s32 %v1959, %v1963
    %v1965 = vadd.s32 %v1964, 536870912
    %v1966 = vshrl.u32 %v1965, 30
    %v1967 = vshll.u32 %v1966, 30
    %v1968 = vsub.s32 %v1964, %v1967
    %vm1969 = vcmp.lt.s32.totalorder %v1968, 0
    %v1970 = vsub.s32 0, %v1968
    %v1971 = vsel %vm1969, %v1970, %v1968
    %v1972 = vclz %v1971
    %v1973 = vsub.s32 %v1972, 2
    %vm1974 = vcmp.gt.s32.totalorder 0, %v1973
    %v1975 = vsel %vm1974, 0, %v1973
    %v1976 = vsub.s32 32, %v1975
    %v1977 = vshll.u32 %v1968, %v1975
    %v1978 = vshrl.u32 %v1960, %v1976
    %v1979 = vor.u32 %v1977, %v1978
    %v1980 = vsub.s32 4294967266, %v1975
    %v1981 = vadd.s32 %v1980, 127
    %v1982 = vshll.u32 %v1981, 23
    %v1983 = vor.u32 4788187, %v1982
    %v1984 = vand.u32 2147483647, %v1983
    %v1986 = vcvt.s32.f32 %v1979
    %v1987 = vmul.f32 %v1986, %v1984
    %v1988 = vxor.u32 %v1987, 2147483648
    %v1989 = vsel %vm1906, %v1988, %v1987
    %v1990 = vsub.s32 4, %v1966
    %v1991 = vsel %vm1906, %v1990, %v1966
    %v1992 = vsel %vm1905, %v970, %v1989
    %v1993 = vsel %vm1905, 0, %v1991
    %v1994 = vcosq.f32.pop %v1992
    %v1995 = vsinq.f32.pop %v1992
    %vm1996 = vweird.f32 %v970
    %v1997 = vand.u32 %v1993, 3
    %vm1998 = vcmp.lt.s32.totalorder %v1997, 2
    %vm1999 = vcmp.eq.s32.totalorder %v1997, 0
    %v2000 = vxor.u32 %v1995, 2147483648
    %v2001 = vsel %vm1999, %v1994, %v2000
    %vm2002 = vcmp.eq.s32.totalorder %v1997, 2
    %v2003 = vxor.u32 %v1994, 2147483648
    %v2004 = vsel %vm2002, %v2003, %v1995
    %v2005 = vsel %vm1998, %v2001, %v2004
    %v2006 = vsel %vm1996, nan, %v2005
    %v2007 = vand.u32 2147483647, %v971
    %vm2008 = vcmp.le.f32.partialorder %v2007, 0.7853982
    %vm2009 = vcmp.lt.s32.totalorder %v971, 0
    %v2010 = vand.u32 %v971, 2139095040
    %v2011 = vshrl.u32 %v2010, 23
    %v2012 = vsub.s32 %v2011, 127
    %v2013 = vand.u32 2147483647, %v971
    %v2014 = vand.u32 %v2013, 8388607
    %v2015 = vor.u32 %v2014, 8388608
    %v2016 = vsub.s32 0, %v2015
    %v2017 = vadd.s32 %v2012, 1
    %vm2018 = vcmp.gt.s32.totalorder %v2017, 0
    %v2019 = vsel %vm2018, %v2017, 0
    %v2020 = vshrl.u32 %v2019, 5
    %v2021 = vand.u32 %v2019, 31
    %v2022 = vsub.s32 32, %v2021
    %v2023 = vshrl.u32 683565275, %v2022
    %v2024 = vshll.u32 683565275, %v2021
    %v2025 = vshrl.u32 2475754826, %v2022
    %v2026 = vor.u32 %v2024, %v2025
    %v2027 = vshll.u32 2475754826, %v2021
    %v2028 = vshrl.u32 2131351028, %v2022
    %v2029 = vor.u32 %v2027, %v2028
    %v2030 = vshll.u32 2131351028, %v2021
    %v2031 = vshrl.u32 2102212464, %v2022
    %v2032 = vor.u32 %v2030, %v2031
    %v2033 = vshll.u32 2102212464, %v2021
    %v2034 = vshrl.u32 920167782, %v2022
    %v2035 = vor.u32 %v2033, %v2034
    %v2036 = vshll.u32 920167782, %v2021
    %v2037 = vshrl.u32 1326507024, %v2022
    %v2038 = vor.u32 %v2036, %v2037
    %vm2039 = vcmp.lt.s32.totalorder %v2020, 1
    %vm2040 = vcmp.lt.s32.totalorder %v2020, 2
    %vm2041 = vcmp.lt.s32.totalorder %v2020, 3
    %vm2042 = vcmp.lt.s32.totalorder %v2020, 4
    %v2043 = vsel %vm2039, %v2023, %v2026
    %v2044 = vsel %vm2042, %v2032, 2102212464
    %v2045 = vsel %vm2041, %v2029, %v2044
    %v2046 = vsel %vm2040, %v2043, %v2045
    %v2047 = vsel %vm2039, %v2026, %v2029
    %v2048 = vsel %vm2042, %v2035, 920167782
    %v2049 = vsel %vm2041, %v2032, %v2048
    %v2050 = vsel %vm2040, %v2047, %v2049
    %v2051 = vsel %vm2039, %v2029, %v2032
    %v2052 = vsel %vm2042, %v2038, 1326507024
    %v2053 = vsel %vm2041, %v2035, %v2052
    %v2054 = vsel %vm2040, %v2051, %v2053
    %v2055 = vshll.u32 %v2015, 8
    %v2056 = vmul.u32.u64.compose %v2055, %v2054
    %v2057 = vextract.low.u32 %v2056
    %v2058 = vextract.high.u32 %v2056
    %v2059 = vmul.u32.u64.compose %v2055, %v2050
    %v2060 = vextract.low.u32 %v2059
    %v2061 = vextract.high.u32 %v2059
    %v2062 = vmul.u32 %v2055, %v2046
    %v2063 = vadd.s32 %v2058, %v2060
    %vm2064 = vc.u32 %v2058, %v2060
    %v2065 = vadd.s32 %v2061, 1
    %v2066 = vsel %vm2064, %v2065, %v2061
    %v2067 = vadd.s32 %v2062, %v2066
    %v2068 = vadd.s32 %v2067, 536870912
    %v2069 = vshrl.u32 %v2068, 30
    %v2070 = vshll.u32 %v2069, 30
    %v2071 = vsub.s32 %v2067, %v2070
    %vm2072 = vcmp.lt.s32.totalorder %v2071, 0
    %v2073 = vsub.s32 0, %v2071
    %v2074 = vsel %vm2072, %v2073, %v2071
    %v2075 = vclz %v2074
    %v2076 = vsub.s32 %v2075, 2
    %vm2077 = vcmp.gt.s32.totalorder 0, %v2076
    %v2078 = vsel %vm2077, 0, %v2076
    %v2079 = vsub.s32 32, %v2078
    %v2080 = vshll.u32 %v2071, %v2078
    %v2081 = vshrl.u32 %v2063, %v2079
    %v2082 = vor.u32 %v2080, %v2081
    %v2083 = vsub.s32 4294967266, %v2078
    %v2084 = vadd.s32 %v2083, 127
    %v2085 = vshll.u32 %v2084, 23
    %v2086 = vor.u32 4788187, %v2085
    %v2087 = vand.u32 2147483647, %v2086
    %v2089 = vcvt.s32.f32 %v2082
    %v2090 = vmul.f32 %v2089, %v2087
    %v2091 = vxor.u32 %v2090, 2147483648
    %v2092 = vsel %vm2009, %v2091, %v2090
    %v2093 = vsub.s32 4, %v2069
    %v2094 = vsel %vm2009, %v2093, %v2069
    %v2095 = vsel %vm2008, %v971, %v2092
    %v2096 = vsel %vm2008, 0, %v2094
    %v2097 = vcosq.f32.pop %v2095
    %v2098 = vsinq.f32.pop %v2095
    %vm2099 = vweird.f32 %v971
    %v2100 = vand.u32 %v2096, 3
    %vm2101 = vcmp.lt.s32.totalorder %v2100, 2
    %vm2102 = vcmp.eq.s32.totalorder %v2100, 0
    %v2103 = vxor.u32 %v2098, 2147483648
    %v2104 = vsel %vm2102, %v2097, %v2103
    %vm2105 = vcmp.eq.s32.totalorder %v2100, 2
    %v2106 = vxor.u32 %v2097, 2147483648
    %v2107 = vsel %vm2105, %v2106, %v2098
    %v2108 = vsel %vm2101, %v2104, %v2107
    %v2109 = vsel %vm2099, nan, %v2108
    %v2110 = vand.u32 2147483647, %v972
    %vm2111 = vcmp.le.f32.partialorder %v2110, 0.7853982
    %vm2112 = vcmp.lt.s32.totalorder %v972, 0
    %v2113 = vand.u32 %v972, 2139095040
    %v2114 = vshrl.u32 %v2113, 23
    %v2115 = vsub.s32 %v2114, 127
    %v2116 = vand.u32 2147483647, %v972
    %v2117 = vand.u32 %v2116, 8388607
    %v2118 = vor.u32 %v2117, 8388608
    %v2119 = vsub.s32 0, %v2118
    %v2120 = vadd.s32 %v2115, 1
    %vm2121 = vcmp.gt.s32.totalorder %v2120, 0
    %v2122 = vsel %vm2121, %v2120, 0
    %v2123 = vshrl.u32 %v2122, 5
    %v2124 = vand.u32 %v2122, 31
    %v2125 = vsub.s32 32, %v2124
    %v2126 = vshrl.u32 683565275, %v2125
    %v2127 = vshll.u32 683565275, %v2124
    %v2128 = vshrl.u32 2475754826, %v2125
    %v2129 = vor.u32 %v2127, %v2128
    %v2130 = vshll.u32 2475754826, %v2124
    %v2131 = vshrl.u32 2131351028, %v2125
    %v2132 = vor.u32 %v2130, %v2131
    %v2133 = vshll.u32 2131351028, %v2124
    %v2134 = vshrl.u32 2102212464, %v2125
    %v2135 = vor.u32 %v2133, %v2134
    %v2136 = vshll.u32 2102212464, %v2124
    %v2137 = vshrl.u32 920167782, %v2125
    %v2138 = vor.u32 %v2136, %v2137
    %v2139 = vshll.u32 920167782, %v2124
    %v2140 = vshrl.u32 1326507024, %v2125
    %v2141 = vor.u32 %v2139, %v2140
    %vm2142 = vcmp.lt.s32.totalorder %v2123, 1
    %vm2143 = vcmp.lt.s32.totalorder %v2123, 2
    %vm2144 = vcmp.lt.s32.totalorder %v2123, 3
    %vm2145 = vcmp.lt.s32.totalorder %v2123, 4
    %v2146 = vsel %vm2142, %v2126, %v2129
    %v2147 = vsel %vm2145, %v2135, 2102212464
    %v2148 = vsel %vm2144, %v2132, %v2147
    %v2149 = vsel %vm2143, %v2146, %v2148
    %v2150 = vsel %vm2142, %v2129, %v2132
    %v2151 = vsel %vm2145, %v2138, 920167782
    %v2152 = vsel %vm2144, %v2135, %v2151
    %v2153 = vsel %vm2143, %v2150, %v2152
    %v2154 = vsel %vm2142, %v2132, %v2135
    %v2155 = vsel %vm2145, %v2141, 1326507024
    %v2156 = vsel %vm2144, %v2138, %v2155
    %v2157 = vsel %vm2143, %v2154, %v2156
    %v2158 = vshll.u32 %v2118, 8
    %v2159 = vmul.u32.u64.compose %v2158, %v2157
    %v2160 = vextract.low.u32 %v2159
    %v2161 = vextract.high.u32 %v2159
    %v2162 = vmul.u32.u64.compose %v2158, %v2153
    %v2163 = vextract.low.u32 %v2162
    %v2164 = vextract.high.u32 %v2162
    %v2165 = vmul.u32 %v2158, %v2149
    %v2166 = vadd.s32 %v2161, %v2163
    %vm2167 = vc.u32 %v2161, %v2163
    %v2168 = vadd.s32 %v2164, 1
    %v2169 = vsel %vm2167, %v2168, %v2164
    %v2170 = vadd.s32 %v2165, %v2169
    %v2171 = vadd.s32 %v2170, 536870912
    %v2172 = vshrl.u32 %v2171, 30
    %v2173 = vshll.u32 %v2172, 30
    %v2174 = vsub.s32 %v2170, %v2173
    %vm2175 = vcmp.lt.s32.totalorder %v2174, 0
    %v2176 = vsub.s32 0, %v2174
    %v2177 = vsel %vm2175, %v2176, %v2174
    %v2178 = vclz %v2177
    %v2179 = vsub.s32 %v2178, 2
    %vm2180 = vcmp.gt.s32.totalorder 0, %v2179
    %v2181 = vsel %vm2180, 0, %v2179
    %v2182 = vsub.s32 32, %v2181
    %v2183 = vshll.u32 %v2174, %v2181
    %v2184 = vshrl.u32 %v2166, %v2182
    %v2185 = vor.u32 %v2183, %v2184
    %v2186 = vsub.s32 4294967266, %v2181
    %v2187 = vadd.s32 %v2186, 127
    %v2188 = vshll.u32 %v2187, 23
    %v2189 = vor.u32 4788187, %v2188
    %v2190 = vand.u32 2147483647, %v2189
    %v2192 = vcvt.s32.f32 %v2185
    %v2193 = vmul.f32 %v2192, %v2190
    %v2194 = vxor.u32 %v2193, 2147483648
    %v2195 = vsel %vm2112, %v2194, %v2193
    %v2196 = vsub.s32 4, %v2172
    %v2197 = vsel %vm2112, %v2196, %v2172
    %v2198 = vsel %vm2111, %v972, %v2195
    %v2199 = vsel %vm2111, 0, %v2197
    %v2200 = vcosq.f32.pop %v2198
    %v2201 = vsinq.f32.pop %v2198
    %vm2202 = vweird.f32 %v972
    %v2203 = vand.u32 %v2199, 3
    %vm2204 = vcmp.lt.s32.totalorder %v2203, 2
    %vm2205 = vcmp.eq.s32.totalorder %v2203, 0
    %v2206 = vxor.u32 %v2201, 2147483648
    %v2207 = vsel %vm2205, %v2200, %v2206
    %vm2208 = vcmp.eq.s32.totalorder %v2203, 2
    %v2209 = vxor.u32 %v2200, 2147483648
    %v2210 = vsel %vm2208, %v2209, %v2201
    %v2211 = vsel %vm2204, %v2207, %v2210
    %v2212 = vsel %vm2202, nan, %v2211
    %v2213 = vand.u32 2147483647, %v973
    %vm2214 = vcmp.le.f32.partialorder %v2213, 0.7853982
    %vm2215 = vcmp.lt.s32.totalorder %v973, 0
    %v2216 = vand.u32 %v973, 2139095040
    %v2217 = vshrl.u32 %v2216, 23
    %v2218 = vsub.s32 %v2217, 127
    %v2219 = vand.u32 2147483647, %v973
    %v2220 = vand.u32 %v2219, 8388607
    %v2221 = vor.u32 %v2220, 8388608
    %v2222 = vsub.s32 0, %v2221
    %v2223 = vadd.s32 %v2218, 1
    %vm2224 = vcmp.gt.s32.totalorder %v2223, 0
    %v2225 = vsel %vm2224, %v2223, 0
    %v2226 = vshrl.u32 %v2225, 5
    %v2227 = vand.u32 %v2225, 31
    %v2228 = vsub.s32 32, %v2227
    %v2229 = vshrl.u32 683565275, %v2228
    %v2230 = vshll.u32 683565275, %v2227
    %v2231 = vshrl.u32 2475754826, %v2228
    %v2232 = vor.u32 %v2230, %v2231
    %v2233 = vshll.u32 2475754826, %v2227
    %v2234 = vshrl.u32 2131351028, %v2228
    %v2235 = vor.u32 %v2233, %v2234
    %v2236 = vshll.u32 2131351028, %v2227
    %v2237 = vshrl.u32 2102212464, %v2228
    %v2238 = vor.u32 %v2236, %v2237
    %v2239 = vshll.u32 2102212464, %v2227
    %v2240 = vshrl.u32 920167782, %v2228
    %v2241 = vor.u32 %v2239, %v2240
    %v2242 = vshll.u32 920167782, %v2227
    %v2243 = vshrl.u32 1326507024, %v2228
    %v2244 = vor.u32 %v2242, %v2243
    %vm2245 = vcmp.lt.s32.totalorder %v2226, 1
    %vm2246 = vcmp.lt.s32.totalorder %v2226, 2
    %vm2247 = vcmp.lt.s32.totalorder %v2226, 3
    %vm2248 = vcmp.lt.s32.totalorder %v2226, 4
    %v2249 = vsel %vm2245, %v2229, %v2232
    %v2250 = vsel %vm2248, %v2238, 2102212464
    %v2251 = vsel %vm2247, %v2235, %v2250
    %v2252 = vsel %vm2246, %v2249, %v2251
    %v2253 = vsel %vm2245, %v2232, %v2235
    %v2254 = vsel %vm2248, %v2241, 920167782
    %v2255 = vsel %vm2247, %v2238, %v2254
    %v2256 = vsel %vm2246, %v2253, %v2255
    %v2257 = vsel %vm2245, %v2235, %v2238
    %v2258 = vsel %vm2248, %v2244, 1326507024
    %v2259 = vsel %vm2247, %v2241, %v2258
    %v2260 = vsel %vm2246, %v2257, %v2259
    %v2261 = vshll.u32 %v2221, 8
    %v2262 = vmul.u32.u64.compose %v2261, %v2260
    %v2263 = vextract.low.u32 %v2262
    %v2264 = vextract.high.u32 %v2262
    %v2265 = vmul.u32.u64.compose %v2261, %v2256
    %v2266 = vextract.low.u32 %v2265
    %v2267 = vextract.high.u32 %v2265
    %v2268 = vmul.u32 %v2261, %v2252
    %v2269 = vadd.s32 %v2264, %v2266
    %vm2270 = vc.u32 %v2264, %v2266
    %v2271 = vadd.s32 %v2267, 1
    %v2272 = vsel %vm2270, %v2271, %v2267
    %v2273 = vadd.s32 %v2268, %v2272
    %v2274 = vadd.s32 %v2273, 536870912
    %v2275 = vshrl.u32 %v2274, 30
    %v2276 = vshll.u32 %v2275, 30
    %v2277 = vsub.s32 %v2273, %v2276
    %vm2278 = vcmp.lt.s32.totalorder %v2277, 0
    %v2279 = vsub.s32 0, %v2277
    %v2280 = vsel %vm2278, %v2279, %v2277
    %v2281 = vclz %v2280
    %v2282 = vsub.s32 %v2281, 2
    %vm2283 = vcmp.gt.s32.totalorder 0, %v2282
    %v2284 = vsel %vm2283, 0, %v2282
    %v2285 = vsub.s32 32, %v2284
    %v2286 = vshll.u32 %v2277, %v2284
    %v2287 = vshrl.u32 %v2269, %v2285
    %v2288 = vor.u32 %v2286, %v2287
    %v2289 = vsub.s32 4294967266, %v2284
    %v2290 = vadd.s32 %v2289, 127
    %v2291 = vshll.u32 %v2290, 23
    %v2292 = vor.u32 4788187, %v2291
    %v2293 = vand.u32 2147483647, %v2292
    %v2295 = vcvt.s32.f32 %v2288
    %v2296 = vmul.f32 %v2295, %v2293
    %v2297 = vxor.u32 %v2296, 2147483648
    %v2298 = vsel %vm2215, %v2297, %v2296
    %v2299 = vsub.s32 4, %v2275
    %v2300 = vsel %vm2215, %v2299, %v2275
    %v2301 = vsel %vm2214, %v973, %v2298
    %v2302 = vsel %vm2214, 0, %v2300
    %v2303 = vcosq.f32.pop %v2301
    %v2304 = vsinq.f32.pop %v2301
    %vm2305 = vweird.f32 %v973
    %v2306 = vand.u32 %v2302, 3
    %vm2307 = vcmp.lt.s32.totalorder %v2306, 2
    %vm2308 = vcmp.eq.s32.totalorder %v2306, 0
    %v2309 = vxor.u32 %v2304, 2147483648
    %v2310 = vsel %vm2308, %v2303, %v2309
    %vm2311 = vcmp.eq.s32.totalorder %v2306, 2
    %v2312 = vxor.u32 %v2303, 2147483648
    %v2313 = vsel %vm2311, %v2312, %v2304
    %v2314 = vsel %vm2307, %v2310, %v2313
    %v2315 = vsel %vm2305, nan, %v2314
    %v2316 = vand.u32 2147483647, %v974
    %vm2317 = vcmp.le.f32.partialorder %v2316, 0.7853982
    %vm2318 = vcmp.lt.s32.totalorder %v974, 0
    %v2319 = vand.u32 %v974, 2139095040
    %v2320 = vshrl.u32 %v2319, 23
    %v2321 = vsub.s32 %v2320, 127
    %v2322 = vand.u32 2147483647, %v974
    %v2323 = vand.u32 %v2322, 8388607
    %v2324 = vor.u32 %v2323, 8388608
    %v2325 = vsub.s32 0, %v2324
    %v2326 = vadd.s32 %v2321, 1
    %vm2327 = vcmp.gt.s32.totalorder %v2326, 0
    %v2328 = vsel %vm2327, %v2326, 0
    %v2329 = vshrl.u32 %v2328, 5
    %v2330 = vand.u32 %v2328, 31
    %v2331 = vsub.s32 32, %v2330
    %v2332 = vshrl.u32 683565275, %v2331
    %v2333 = vshll.u32 683565275, %v2330
    %v2334 = vshrl.u32 2475754826, %v2331
    %v2335 = vor.u32 %v2333, %v2334
    %v2336 = vshll.u32 2475754826, %v2330
    %v2337 = vshrl.u32 2131351028, %v2331
    %v2338 = vor.u32 %v2336, %v2337
    %v2339 = vshll.u32 2131351028, %v2330
    %v2340 = vshrl.u32 2102212464, %v2331
    %v2341 = vor.u32 %v2339, %v2340
    %v2342 = vshll.u32 2102212464, %v2330
    %v2343 = vshrl.u32 920167782, %v2331
    %v2344 = vor.u32 %v2342, %v2343
    %v2345 = vshll.u32 920167782, %v2330
    %v2346 = vshrl.u32 1326507024, %v2331
    %v2347 = vor.u32 %v2345, %v2346
    %vm2348 = vcmp.lt.s32.totalorder %v2329, 1
    %vm2349 = vcmp.lt.s32.totalorder %v2329, 2
    %vm2350 = vcmp.lt.s32.totalorder %v2329, 3
    %vm2351 = vcmp.lt.s32.totalorder %v2329, 4
    %v2352 = vsel %vm2348, %v2332, %v2335
    %v2353 = vsel %vm2351, %v2341, 2102212464
    %v2354 = vsel %vm2350, %v2338, %v2353
    %v2355 = vsel %vm2349, %v2352, %v2354
    %v2356 = vsel %vm2348, %v2335, %v2338
    %v2357 = vsel %vm2351, %v2344, 920167782
    %v2358 = vsel %vm2350, %v2341, %v2357
    %v2359 = vsel %vm2349, %v2356, %v2358
    %v2360 = vsel %vm2348, %v2338, %v2341
    %v2361 = vsel %vm2351, %v2347, 1326507024
    %v2362 = vsel %vm2350, %v2344, %v2361
    %v2363 = vsel %vm2349, %v2360, %v2362
    %v2364 = vshll.u32 %v2324, 8
    %v2365 = vmul.u32.u64.compose %v2364, %v2363
    %v2366 = vextract.low.u32 %v2365
    %v2367 = vextract.high.u32 %v2365
    %v2368 = vmul.u32.u64.compose %v2364, %v2359
    %v2369 = vextract.low.u32 %v2368
    %v2370 = vextract.high.u32 %v2368
    %v2371 = vmul.u32 %v2364, %v2355
    %v2372 = vadd.s32 %v2367, %v2369
    %vm2373 = vc.u32 %v2367, %v2369
    %v2374 = vadd.s32 %v2370, 1
    %v2375 = vsel %vm2373, %v2374, %v2370
    %v2376 = vadd.s32 %v2371, %v2375
    %v2377 = vadd.s32 %v2376, 536870912
    %v2378 = vshrl.u32 %v2377, 30
    %v2379 = vshll.u32 %v2378, 30
    %v2380 = vsub.s32 %v2376, %v2379
    %vm2381 = vcmp.lt.s32.totalorder %v2380, 0
    %v2382 = vsub.s32 0, %v2380
    %v2383 = vsel %vm2381, %v2382, %v2380
    %v2384 = vclz %v2383
    %v2385 = vsub.s32 %v2384, 2
    %vm2386 = vcmp.gt.s32.totalorder 0, %v2385
    %v2387 = vsel %vm2386, 0, %v2385
    %v2388 = vsub.s32 32, %v2387
    %v2389 = vshll.u32 %v2380, %v2387
    %v2390 = vshrl.u32 %v2372, %v2388
    %v2391 = vor.u32 %v2389, %v2390
    %v2392 = vsub.s32 4294967266, %v2387
    %v2393 = vadd.s32 %v2392, 127
    %v2394 = vshll.u32 %v2393, 23
    %v2395 = vor.u32 4788187, %v2394
    %v2396 = vand.u32 2147483647, %v2395
    %v2398 = vcvt.s32.f32 %v2391
    %v2399 = vmul.f32 %v2398, %v2396
    %v2400 = vxor.u32 %v2399, 2147483648
    %v2401 = vsel %vm2318, %v2400, %v2399
    %v2402 = vsub.s32 4, %v2378
    %v2403 = vsel %vm2318, %v2402, %v2378
    %v2404 = vsel %vm2317, %v974, %v2401
    %v2405 = vsel %vm2317, 0, %v2403
    %v2406 = vcosq.f32.pop %v2404
    %v2407 = vsinq.f32.pop %v2404
    %vm2408 = vweird.f32 %v974
    %v2409 = vand.u32 %v2405, 3
    %vm2410 = vcmp.lt.s32.totalorder %v2409, 2
    %vm2411 = vcmp.eq.s32.totalorder %v2409, 0
    %v2412 = vxor.u32 %v2407, 2147483648
    %v2413 = vsel %vm2411, %v2406, %v2412
    %vm2414 = vcmp.eq.s32.totalorder %v2409, 2
    %v2415 = vxor.u32 %v2406, 2147483648
    %v2416 = vsel %vm2414, %v2415, %v2407
    %v2417 = vsel %vm2410, %v2413, %v2416
    %v2418 = vsel %vm2408, nan, %v2417
    %v2419 = vand.u32 2147483647, %v975
    %vm2420 = vcmp.le.f32.partialorder %v2419, 0.7853982
    %vm2421 = vcmp.lt.s32.totalorder %v975, 0
    %v2422 = vand.u32 %v975, 2139095040
    %v2423 = vshrl.u32 %v2422, 23
    %v2424 = vsub.s32 %v2423, 127
    %v2425 = vand.u32 2147483647, %v975
    %v2426 = vand.u32 %v2425, 8388607
    %v2427 = vor.u32 %v2426, 8388608
    %v2428 = vsub.s32 0, %v2427
    %v2429 = vadd.s32 %v2424, 1
    %vm2430 = vcmp.gt.s32.totalorder %v2429, 0
    %v2431 = vsel %vm2430, %v2429, 0
    %v2432 = vshrl.u32 %v2431, 5
    %v2433 = vand.u32 %v2431, 31
    %v2434 = vsub.s32 32, %v2433
    %v2435 = vshrl.u32 683565275, %v2434
    %v2436 = vshll.u32 683565275, %v2433
    %v2437 = vshrl.u32 2475754826, %v2434
    %v2438 = vor.u32 %v2436, %v2437
    %v2439 = vshll.u32 2475754826, %v2433
    %v2440 = vshrl.u32 2131351028, %v2434
    %v2441 = vor.u32 %v2439, %v2440
    %v2442 = vshll.u32 2131351028, %v2433
    %v2443 = vshrl.u32 2102212464, %v2434
    %v2444 = vor.u32 %v2442, %v2443
    %v2445 = vshll.u32 2102212464, %v2433
    %v2446 = vshrl.u32 920167782, %v2434
    %v2447 = vor.u32 %v2445, %v2446
    %v2448 = vshll.u32 920167782, %v2433
    %v2449 = vshrl.u32 1326507024, %v2434
    %v2450 = vor.u32 %v2448, %v2449
    %vm2451 = vcmp.lt.s32.totalorder %v2432, 1
    %vm2452 = vcmp.lt.s32.totalorder %v2432, 2
    %vm2453 = vcmp.lt.s32.totalorder %v2432, 3
    %vm2454 = vcmp.lt.s32.totalorder %v2432, 4
    %v2455 = vsel %vm2451, %v2435, %v2438
    %v2456 = vsel %vm2454, %v2444, 2102212464
    %v2457 = vsel %vm2453, %v2441, %v2456
    %v2458 = vsel %vm2452, %v2455, %v2457
    %v2459 = vsel %vm2451, %v2438, %v2441
    %v2460 = vsel %vm2454, %v2447, 920167782
    %v2461 = vsel %vm2453, %v2444, %v2460
    %v2462 = vsel %vm2452, %v2459, %v2461
    %v2463 = vsel %vm2451, %v2441, %v2444
    %v2464 = vsel %vm2454, %v2450, 1326507024
    %v2465 = vsel %vm2453, %v2447, %v2464
    %v2466 = vsel %vm2452, %v2463, %v2465
    %v2467 = vshll.u32 %v2427, 8
    %v2468 = vmul.u32.u64.compose %v2467, %v2466
    %v2469 = vextract.low.u32 %v2468
    %v2470 = vextract.high.u32 %v2468
    %v2471 = vmul.u32.u64.compose %v2467, %v2462
    %v2472 = vextract.low.u32 %v2471
    %v2473 = vextract.high.u32 %v2471
    %v2474 = vmul.u32 %v2467, %v2458
    %v2475 = vadd.s32 %v2470, %v2472
    %vm2476 = vc.u32 %v2470, %v2472
    %v2477 = vadd.s32 %v2473, 1
    %v2478 = vsel %vm2476, %v2477, %v2473
    %v2479 = vadd.s32 %v2474, %v2478
    %v2480 = vadd.s32 %v2479, 536870912
    %v2481 = vshrl.u32 %v2480, 30
    %v2482 = vshll.u32 %v2481, 30
    %v2483 = vsub.s32 %v2479, %v2482
    %vm2484 = vcmp.lt.s32.totalorder %v2483, 0
    %v2485 = vsub.s32 0, %v2483
    %v2486 = vsel %vm2484, %v2485, %v2483
    %v2487 = vclz %v2486
    %v2488 = vsub.s32 %v2487, 2
    %vm2489 = vcmp.gt.s32.totalorder 0, %v2488
    %v2490 = vsel %vm2489, 0, %v2488
    %v2491 = vsub.s32 32, %v2490
    %v2492 = vshll.u32 %v2483, %v2490
    %v2493 = vshrl.u32 %v2475, %v2491
    %v2494 = vor.u32 %v2492, %v2493
    %v2495 = vsub.s32 4294967266, %v2490
    %v2496 = vadd.s32 %v2495, 127
    %v2497 = vshll.u32 %v2496, 23
    %v2498 = vor.u32 4788187, %v2497
    %v2499 = vand.u32 2147483647, %v2498
    %v2501 = vcvt.s32.f32 %v2494
    %v2502 = vmul.f32 %v2501, %v2499
    %v2503 = vxor.u32 %v2502, 2147483648
    %v2504 = vsel %vm2421, %v2503, %v2502
    %v2505 = vsub.s32 4, %v2481
    %v2506 = vsel %vm2421, %v2505, %v2481
    %v2507 = vsel %vm2420, %v975, %v2504
    %v2508 = vsel %vm2420, 0, %v2506
    %v2509 = vcosq.f32.pop %v2507
    %v2510 = vsinq.f32.pop %v2507
    %vm2511 = vweird.f32 %v975
    %v2512 = vand.u32 %v2508, 3
    %vm2513 = vcmp.lt.s32.totalorder %v2512, 2
    %vm2514 = vcmp.eq.s32.totalorder %v2512, 0
    %v2515 = vxor.u32 %v2510, 2147483648
    %v2516 = vsel %vm2514, %v2509, %v2515
    %vm2517 = vcmp.eq.s32.totalorder %v2512, 2
    %v2518 = vxor.u32 %v2509, 2147483648
    %v2519 = vsel %vm2517, %v2518, %v2510
    %v2520 = vsel %vm2513, %v2516, %v2519
    %v2521 = vsel %vm2511, nan, %v2520
    %v2522 = vand.u32 2147483647, %v976
    %vm2523 = vcmp.le.f32.partialorder %v2522, 0.7853982
    %vm2524 = vcmp.lt.s32.totalorder %v976, 0
    %v2525 = vand.u32 %v976, 2139095040
    %v2526 = vshrl.u32 %v2525, 23
    %v2527 = vsub.s32 %v2526, 127
    %v2528 = vand.u32 2147483647, %v976
    %v2529 = vand.u32 %v2528, 8388607
    %v2530 = vor.u32 %v2529, 8388608
    %v2531 = vsub.s32 0, %v2530
    %v2532 = vadd.s32 %v2527, 1
    %vm2533 = vcmp.gt.s32.totalorder %v2532, 0
    %v2534 = vsel %vm2533, %v2532, 0
    %v2535 = vshrl.u32 %v2534, 5
    %v2536 = vand.u32 %v2534, 31
    %v2537 = vsub.s32 32, %v2536
    %v2538 = vshrl.u32 683565275, %v2537
    %v2539 = vshll.u32 683565275, %v2536
    %v2540 = vshrl.u32 2475754826, %v2537
    %v2541 = vor.u32 %v2539, %v2540
    %v2542 = vshll.u32 2475754826, %v2536
    %v2543 = vshrl.u32 2131351028, %v2537
    %v2544 = vor.u32 %v2542, %v2543
    %v2545 = vshll.u32 2131351028, %v2536
    %v2546 = vshrl.u32 2102212464, %v2537
    %v2547 = vor.u32 %v2545, %v2546
    %v2548 = vshll.u32 2102212464, %v2536
    %v2549 = vshrl.u32 920167782, %v2537
    %v2550 = vor.u32 %v2548, %v2549
    %v2551 = vshll.u32 920167782, %v2536
    %v2552 = vshrl.u32 1326507024, %v2537
    %v2553 = vor.u32 %v2551, %v2552
    %vm2554 = vcmp.lt.s32.totalorder %v2535, 1
    %vm2555 = vcmp.lt.s32.totalorder %v2535, 2
    %vm2556 = vcmp.lt.s32.totalorder %v2535, 3
    %vm2557 = vcmp.lt.s32.totalorder %v2535, 4
    %v2558 = vsel %vm2554, %v2538, %v2541
    %v2559 = vsel %vm2557, %v2547, 2102212464
    %v2560 = vsel %vm2556, %v2544, %v2559
    %v2561 = vsel %vm2555, %v2558, %v2560
    %v2562 = vsel %vm2554, %v2541, %v2544
    %v2563 = vsel %vm2557, %v2550, 920167782
    %v2564 = vsel %vm2556, %v2547, %v2563
    %v2565 = vsel %vm2555, %v2562, %v2564
    %v2566 = vsel %vm2554, %v2544, %v2547
    %v2567 = vsel %vm2557, %v2553, 1326507024
    %v2568 = vsel %vm2556, %v2550, %v2567
    %v2569 = vsel %vm2555, %v2566, %v2568
    %v2570 = vshll.u32 %v2530, 8
    %v2571 = vmul.u32.u64.compose %v2570, %v2569
    %v2572 = vextract.low.u32 %v2571
    %v2573 = vextract.high.u32 %v2571
    %v2574 = vmul.u32.u64.compose %v2570, %v2565
    %v2575 = vextract.low.u32 %v2574
    %v2576 = vextract.high.u32 %v2574
    %v2577 = vmul.u32 %v2570, %v2561
    %v2578 = vadd.s32 %v2573, %v2575
    %vm2579 = vc.u32 %v2573, %v2575
    %v2580 = vadd.s32 %v2576, 1
    %v2581 = vsel %vm2579, %v2580, %v2576
    %v2582 = vadd.s32 %v2577, %v2581
    %v2583 = vadd.s32 %v2582, 536870912
    %v2584 = vshrl.u32 %v2583, 30
    %v2585 = vshll.u32 %v2584, 30
    %v2586 = vsub.s32 %v2582, %v2585
    %vm2587 = vcmp.lt.s32.totalorder %v2586, 0
    %v2588 = vsub.s32 0, %v2586
    %v2589 = vsel %vm2587, %v2588, %v2586
    %v2590 = vclz %v2589
    %v2591 = vsub.s32 %v2590, 2
    %vm2592 = vcmp.gt.s32.totalorder 0, %v2591
    %v2593 = vsel %vm2592, 0, %v2591
    %v2594 = vsub.s32 32, %v2593
    %v2595 = vshll.u32 %v2586, %v2593
    %v2596 = vshrl.u32 %v2578, %v2594
    %v2597 = vor.u32 %v2595, %v2596
    %v2598 = vsub.s32 4294967266, %v2593
    %v2599 = vadd.s32 %v2598, 127
    %v2600 = vshll.u32 %v2599, 23
    %v2601 = vor.u32 4788187, %v2600
    %v2602 = vand.u32 2147483647, %v2601
    %v2604 = vcvt.s32.f32 %v2597
    %v2605 = vmul.f32 %v2604, %v2602
    %v2606 = vxor.u32 %v2605, 2147483648
    %v2607 = vsel %vm2524, %v2606, %v2605
    %v2608 = vsub.s32 4, %v2584
    %v2609 = vsel %vm2524, %v2608, %v2584
    %v2610 = vsel %vm2523, %v976, %v2607
    %v2611 = vsel %vm2523, 0, %v2609
    %v2612 = vcosq.f32.pop %v2610
    %v2613 = vsinq.f32.pop %v2610
    %vm2614 = vweird.f32 %v976
    %v2615 = vand.u32 %v2611, 3
    %vm2616 = vcmp.lt.s32.totalorder %v2615, 2
    %vm2617 = vcmp.eq.s32.totalorder %v2615, 0
    %v2618 = vxor.u32 %v2613, 2147483648
    %v2619 = vsel %vm2617, %v2612, %v2618
    %vm2620 = vcmp.eq.s32.totalorder %v2615, 2
    %v2621 = vxor.u32 %v2612, 2147483648
    %v2622 = vsel %vm2620, %v2621, %v2613
    %v2623 = vsel %vm2616, %v2619, %v2622
    %v2624 = vsel %vm2614, nan, %v2623
    %2625 = vst [vmem:[#allocation8] sm:$0xff] %v1079
    %2626 = vst [vmem:[#allocation8 + $0x8] sm:$0xff] %v1182
    %2627 = vst [vmem:[#allocation8 + $0x10] sm:$0xff] %v1285
    %2628 = vst [vmem:[#allocation8 + $0x18] sm:$0xff] %v1388
    %2629 = vst [vmem:[#allocation8 + $0x20] sm:$0xff] %v1491
    %2630 = vst [vmem:[#allocation8 + $0x28] sm:$0xff] %v1594
    %2631 = vst [vmem:[#allocation8 + $0x30] sm:$0xff] %v1697
    %2632 = vst [vmem:[#allocation8 + $0x38] sm:$0xff] %v1800
    %2633 = vst [vmem:[#allocation8 + $0x40] sm:$0xff] %v1903
    %2634 = vst [vmem:[#allocation8 + $0x48] sm:$0xff] %v2006
    %2635 = vst [vmem:[#allocation8 + $0x50] sm:$0xff] %v2109
    %2636 = vst [vmem:[#allocation8 + $0x58] sm:$0xff] %v2212
    %2637 = vst [vmem:[#allocation8 + $0x60] sm:$0xff] %v2315
    %2638 = vst [vmem:[#allocation8 + $0x68] sm:$0xff] %v2418
    %2639 = vst [vmem:[#allocation8 + $0x70] sm:$0xff] %v2521
    %2640 = vst [vmem:[#allocation8 + $0x78] sm:$0xff] %v2624
    // Predicated region
    $region26: #{tpu_custom_call.1} parent=1 // pred_check
      _
    $region27: #{tpu_custom_call.1} parent=1 // pred_check_branch
      %2642 = sbr.rel (0) target = $region29
    $region28: #{tpu_custom_call.1} parent=1 // pred_region
      %s2644 = ssub.s32 2048, 2048
      %2645 = vsyncadd [#allocation4], %s2644
      %s2647 = sshll.u32 [#allocation8], 4
      %s2648 = int_to_ptr.vmem [resolvable:$true] %s2647
      %2650 = dma.vmem_to_hbm [thread:$0]  %s2648, 2048, %s3, [#allocation4]
    $region29: #{tpu_custom_call.1} parent=1 // pred_fallthru
      _
    // Predicated region
    $region30: #{tpu_custom_call.1} parent=1 // pred_check
      _
    $region31: #{tpu_custom_call.1} parent=1 // pred_check_branch
      %2652 = sbr.rel (0) target = $region33
    $region32: #{tpu_custom_call.1} parent=1 // pred_region
      %2653 = dma.done [#allocation4], 2048
    $region33: #{tpu_custom_call.1} parent=1 // pred_fallthru
      _
    %2654 = vsyncpa [#allocation3], 1
    %2655 = vsyncpa [#allocation6], 1
    %2656 = vsyncpa [#allocation4], 1

</llo_original>
